<compile_context>
chip_gen: v6e
topology: v6e:2x2x1
jax: 0.10.0
libtpu: 0.0.40
codegen_flags: <defaults>
</compile_context>

<pallas_src>
import functools

import jax
import jax.numpy as jnp
from jax.experimental import pallas as pl
from jax.experimental.pallas import tpu as pltpu


# ----------------------------- Pallas kernel ---------------------------------

def lstm_model_kernel(x_ref,              # (T*B, D)   time-major, flattened, f32
                      wih0_ref,           # (D, 4H)    f32
                      whh0_ref,           # (H, 4H)    bf16 (serial-path weight)
                      wih1_ref,           # (H, 4H)    f32
                      whh1_ref,           # (H, 4H)    bf16 (serial-path weight)
                      b01_ref,            # (2, 4H)    f32: [b0 ; b1]
                      wfc1_ref,           # (H, H//2)  f32, BatchNorm folded in
                      head_ref,           # (3, H//2)  f32: [b_fc1' ; w2_row ; b_fc2 pad]
                      out_ref,            # (B, 1)     f32
                      xg_ref,             # VMEM scratch (T*B, 4H) f32 (reused layer0/layer1)
                      h0a_ref,            # VMEM scratch (T*B, H)  f32
                      *, T, B, H):
    def gates_to_hc(gates, c):
        # Full-width activations on the (B, 4H) tile (EUP), then slice i/f/g/o.
        sig = jax.nn.sigmoid(gates)
        tg = jnp.tanh(gates)
        i = sig[:, 0 * H:1 * H]
        f = sig[:, 1 * H:2 * H]
        o = sig[:, 3 * H:4 * H]
        g = tg[:, 2 * H:3 * H]
        c_new = f * c + i * g
        h_new = o * jnp.tanh(c_new)
        return h_new, c_new

    # ---- Phase 1: layer 0 ----------------------------------------------------
    # Hoisted input projection (all timesteps, one MXU matmul), staged in VMEM.
    xg_ref[...] = (jnp.dot(x_ref[...], wih0_ref[...],
                           preferred_element_type=jnp.float32)
                   + b01_ref[0:1, :])

    whh0 = whh0_ref[...]                               # bf16, loop-invariant
    h0 = jnp.zeros((B, H), jnp.float32)
    c0 = jnp.zeros((B, H), jnp.float32)
    for t in range(T):                                 # T is small and static
        g0 = (xg_ref[pl.ds(t * B, B), :]
              + jnp.dot(h0.astype(jnp.bfloat16), whh0,
                        preferred_element_type=jnp.float32))
        h0, c0 = gates_to_hc(g0, c0)
        h0a_ref[pl.ds(t * B, B), :] = h0

    # ---- Phase 2: hoisted layer-1 input projection -----------------------------
    # (inter-layer dropout p=0.4 is identity in eval mode)
    xg_ref[...] = (jnp.dot(h0a_ref[...], wih1_ref[...],
                           preferred_element_type=jnp.float32)
                   + b01_ref[1:2, :])

    # ---- Phase 3: layer 1 (only h1 @ Whh1 on the serial path) ------------------
    whh1 = whh1_ref[...]                               # bf16, loop-invariant
    h1 = jnp.zeros((B, H), jnp.float32)
    c1 = jnp.zeros((B, H), jnp.float32)
    for t in range(T):
        g1 = (xg_ref[pl.ds(t * B, B), :]
              + jnp.dot(h1.astype(jnp.bfloat16), whh1,
                        preferred_element_type=jnp.float32))
        h1, c1 = gates_to_hc(g1, c1)

    # ---- Head: (BatchNorm folded into) fc1 -> relu -> (dropout=id) -> fc2 ------
    z = (jnp.dot(h1, wfc1_ref[...], preferred_element_type=jnp.float32)
         + head_ref[0:1, :])
    z = jnp.maximum(z, 0.0)
    # fc2 has N=1: VPU multiply + lane reduce instead of a lane-sparse MXU push.
    out = jnp.sum(z * head_ref[1:2, :], axis=1, keepdims=True) + head_ref[2:3, 0:1]
    out_ref[...] = out.astype(out_ref.dtype)


# ------------------------------ Wrapper ---------------------------------------

def lstm_model_forward(x, params):
    """Returns (out, l1_term) matching LSTMModel.forward (eval semantics)."""
    B, T, D = x.shape
    H = params["whh0"].shape[1]
    Hh = H // 2
    eps = 1e-5

    # Time-major, flattened input so the layer-0 projection is one matmul and
    # per-timestep slices are contiguous sublane rows.
    x_flat = jnp.transpose(x, (1, 0, 2)).reshape(T * B, D)         # (T*B, D)

    # Weights pre-transposed to (in_features, out_features); recurrent weights
    # (serial path) cast to bf16 for native-MXU matmuls.
    wih0 = params["wih0"].T                                        # (D, 4H) f32
    whh0 = params["whh0"].T.astype(jnp.bfloat16)                   # (H, 4H) bf16
    wih1 = params["wih1"].T                                        # (H, 4H) f32
    whh1 = params["whh1"].T.astype(jnp.bfloat16)                   # (H, 4H) bf16

    # Packed biases: row 0 = layer-0 bias, row 1 = layer-1 bias.
    b01 = jnp.stack([params["bih0"] + params["bhh0"],
                     params["bih1"] + params["bhh1"]], axis=0)     # (2, 4H)

    # BatchNorm (eval) folded directly into fc1.
    inv_std = 1.0 / jnp.sqrt(params["bn_var"] + eps)
    bn_scale = params["bn_gamma"] * inv_std                        # (H,)
    bn_shift = params["bn_beta"] - params["bn_mean"] * bn_scale    # (H,)
    w_fc1_t = params["w_fc1"].T                                    # (H, Hh)
    wfc1_folded = bn_scale[:, None] * w_fc1_t                      # (H, Hh)
    bfc1_folded = bn_shift @ w_fc1_t + params["b_fc1"]             # (Hh,)

    # Packed head vectors: [b_fc1' ; w_fc2 row ; b_fc2 (padded)].
    head = jnp.zeros((3, Hh), jnp.float32)
    head = head.at[0].set(bfc1_folded)
    head = head.at[1].set(params["w_fc2"][0])
    head = head.at[2, 0].set(params["b_fc2"][0])

    kernel = functools.partial(lstm_model_kernel, T=T, B=B, H=H)

    # Single invocation: every operand is tiny, so each is placed whole in VMEM
    # (full-array blocks) and the recurrence runs entirely in-kernel.
    # VMEM footprint ~ T*B*(D + 8H)*4 bytes + weights  (<100 KiB here) — far
    # under the 32 MiB scoped default on v5e/v6e/v7x.
    out = pl.pallas_call(
        kernel,
        out_shape=jax.ShapeDtypeStruct((B, 1), jnp.float32),
        scratch_shapes=[pltpu.VMEM((T * B, 4 * H), jnp.float32),   # xg (reused)
                        pltpu.VMEM((T * B, H), jnp.float32)],      # h0_all
    )(x_flat, wih0, whh0, wih1, whh1, b01, wfc1_folded, head)

    # L1 regularization term: 0.01 * sum_p ||p||_1 (tiny scalar reduction, glue-side).
    param_list = [
        params["wih0"], params["whh0"], params["bih0"], params["bhh0"],
        params["wih1"], params["whh1"], params["bih1"], params["bhh1"],
        params["bn_gamma"], params["bn_beta"],
        params["w_fc1"], params["b_fc1"], params["w_fc2"], params["b_fc2"],
    ]
    l1 = sum(jnp.sum(jnp.abs(p)) for p in param_list)
    return out, 0.01 * l1


# --------------------------- Param init & reference ---------------------------

def init_params(key, D, H):
    Hh = H // 2
    keys = jax.random.split(key, 12)
    k_lstm = 1.0 / jnp.sqrt(H)

    def u(kk, shape, bound):
        return jax.random.uniform(kk, shape, jnp.float32, -bound, bound)

    params = {
        # LSTM layer 0
        "wih0": u(keys[0], (4 * H, D), k_lstm),
        "whh0": u(keys[1], (4 * H, H), k_lstm),
        "bih0": u(keys[2], (4 * H,), k_lstm),
        "bhh0": u(keys[3], (4 * H,), k_lstm),
        # LSTM layer 1
        "wih1": u(keys[4], (4 * H, H), k_lstm),
        "whh1": u(keys[5], (4 * H, H), k_lstm),
        "bih1": u(keys[6], (4 * H,), k_lstm),
        "bhh1": u(keys[7], (4 * H,), k_lstm),
        # BatchNorm1d (fresh init: gamma=1, beta=0, running mean/var = 0/1)
        "bn_gamma": jnp.ones((H,), jnp.float32),
        "bn_beta": jnp.zeros((H,), jnp.float32),
        "bn_mean": jnp.zeros((H,), jnp.float32),
        "bn_var": jnp.ones((H,), jnp.float32),
        # fc1 / fc2 (PyTorch Linear default uniform init)
        "w_fc1": u(keys[8], (Hh, H), 1.0 / jnp.sqrt(H)),
        "b_fc1": u(keys[9], (Hh,), 1.0 / jnp.sqrt(H)),
        "w_fc2": u(keys[10], (1, Hh), 1.0 / jnp.sqrt(Hh)),
        "b_fc2": u(keys[11], (1,), 1.0 / jnp.sqrt(Hh)),
    }
    return params


def reference_forward(x, params):
    """Pure-JAX reference (eval semantics, f32) for validation."""
    B, T, D = x.shape
    H = params["whh0"].shape[1]
    eps = 1e-5

    def cell(x_t, h, c, wih, whh, bih, bhh):
        gates = x_t @ wih.T + h @ whh.T + bih + bhh
        i, f, g, o = jnp.split(gates, 4, axis=-1)
        c_new = jax.nn.sigmoid(f) * c + jax.nn.sigmoid(i) * jnp.tanh(g)
        h_new = jax.nn.sigmoid(o) * jnp.tanh(c_new)
        return h_new, c_new

    h0 = c0 = h1 = c1 = jnp.zeros((B, H), jnp.float32)
    for t in range(T):
        h0, c0 = cell(x[:, t, :], h0, c0,
                      params["wih0"], params["whh0"], params["bih0"], params["bhh0"])
        h1, c1 = cell(h0, h1, c1,
                      params["wih1"], params["whh1"], params["bih1"], params["bhh1"])

    normalized = (h1 - params["bn_mean"]) / jnp.sqrt(params["bn_var"] + eps) \
        * params["bn_gamma"] + params["bn_beta"]
    z = jnp.maximum(normalized @ params["w_fc1"].T + params["b_fc1"], 0.0)
    out = z @ params["w_fc2"].T + params["b_fc2"]
    return out


# ----------------------------------- Main --------------------------------------

if __name__ == "__main__":
    # B chosen as a multiple of 8 (f32 sublanes).
    B, T, D, H = 8, 8, 16, 32
    key = jax.random.PRNGKey(0)
    kx, kp = jax.random.split(key)

    x = jax.random.normal(kx, (B, T, D), jnp.float32)
    params = init_params(kp, D, H)

    out, l1_term = lstm_model_forward(x, params)
    out = jax.block_until_ready(out)
    l1_term = jax.block_until_ready(l1_term)

    ref = reference_forward(x, params)
    assert out.shape == (B, 1)
    # Tolerance relaxed vs. the f32-only version: the serial-path matmuls now
    # run with bf16 MXU operands (f32 accumulation).
    assert jnp.allclose(out, ref, atol=2e-2, rtol=2e-2), (
        f"mismatch: max abs err {jnp.max(jnp.abs(out - ref))}")
    assert jnp.isfinite(l1_term)

    print("KERNEL_OK")
</pallas_src>

<mosaic_0001>
module attributes {stable_mosaic.version = 11 : i64} {
  func.func @lstm_model_kernel(%arg0: memref<64x16xf32, #tpu.memory_space<vmem>>, %arg1: memref<16x128xf32, #tpu.memory_space<vmem>>, %arg2: memref<32x128xbf16, #tpu.memory_space<vmem>>, %arg3: memref<32x128xf32, #tpu.memory_space<vmem>>, %arg4: memref<32x128xbf16, #tpu.memory_space<vmem>>, %arg5: memref<2x128xf32, #tpu.memory_space<vmem>>, %arg6: memref<32x16xf32, #tpu.memory_space<vmem>>, %arg7: memref<3x16xf32, #tpu.memory_space<vmem>>, %arg8: memref<8x1xf32, #tpu.memory_space<vmem>>, %arg9: memref<64x128xf32, #tpu.memory_space<vmem>>, %arg10: memref<64x32xf32, #tpu.memory_space<vmem>>) attributes {dimension_semantics = [], scalar_prefetch = 0 : i64, scratch_operands = 2 : i64, tpu.core_type = #tpu.core_type<tc>} {
    %c0 = arith.constant 0 : index
    %c0_0 = arith.constant 0 : index
    %0 = vector.load %arg0[%c0, %c0_0] : memref<64x16xf32, #tpu.memory_space<vmem>>, vector<64x16xf32>
    %c0_1 = arith.constant 0 : index
    %c0_2 = arith.constant 0 : index
    %1 = vector.load %arg1[%c0_1, %c0_2] : memref<16x128xf32, #tpu.memory_space<vmem>>, vector<16x128xf32>
    %cst = arith.constant dense<0.000000e+00> : vector<64x128xf32>
    %2 = tpu.matmul %0, %1, %cst {dimension_numbers = #tpu.dot_dimension_numbers<[1], [0], [0], [1], [0, 0, 1, 1], [], []>} : vector<64x16xf32>, vector<16x128xf32>, vector<64x128xf32> -> vector<64x128xf32>
    %c0_3 = arith.constant 0 : index
    %c0_4 = arith.constant 0 : index
    %3 = vector.load %arg5[%c0_3, %c0_4] : memref<2x128xf32, #tpu.memory_space<vmem>>, vector<1x128xf32>
    %4 = vector.broadcast %3 : vector<1x128xf32> to vector<64x128xf32>
    %5 = arith.addf %2, %4 : vector<64x128xf32>
    %c0_5 = arith.constant 0 : index
    %c0_6 = arith.constant 0 : index
    %6 = vector.load %arg9[%c0_5, %c0_6] : memref<64x128xf32, #tpu.memory_space<vmem>>, vector<64x128xf32>
    tpu.vector_store %arg9[%c0_5, %c0_6], %5 {strides = array<i32>} : memref<64x128xf32, #tpu.memory_space<vmem>>, vector<64x128xf32>,
    %c0_7 = arith.constant 0 : index
    %c0_8 = arith.constant 0 : index
    %7 = vector.load %arg2[%c0_7, %c0_8] : memref<32x128xbf16, #tpu.memory_space<vmem>>, vector<32x128xbf16>
    %cst_9 = arith.constant 0.000000e+00 : f32
    %8 = vector.broadcast %cst_9 : f32 to vector<8x32xf32>
    %cst_10 = arith.constant 0.000000e+00 : f32
    %9 = vector.broadcast %cst_10 : f32 to vector<8x32xf32>
    %c0_11 = arith.constant 0 : index
    %c0_12 = arith.constant 0 : index
    %10 = vector.load %arg9[%c0_11, %c0_12] : memref<64x128xf32, #tpu.memory_space<vmem>>, vector<8x128xf32>
    %11 = arith.truncf %8 : vector<8x32xf32> to vector<8x32xbf16>
    %cst_13 = arith.constant dense<0.000000e+00> : vector<8x128xf32>
    %12 = tpu.matmul %11, %7, %cst_13 {dimension_numbers = #tpu.dot_dimension_numbers<[1], [0], [0], [1], [0, 0, 1, 1], [], []>} : vector<8x32xbf16>, vector<32x128xbf16>, vector<8x128xf32> -> vector<8x128xf32>
    %13 = arith.addf %10, %12 : vector<8x128xf32>
    %14 = arith.negf %13 : vector<8x128xf32>
    %15 = math.exp %14 : vector<8x128xf32>
    %cst_14 = arith.constant 1.000000e+00 : f32
    %16 = vector.broadcast %cst_14 : f32 to vector<8x128xf32>
    %17 = arith.addf %16, %15 : vector<8x128xf32>
    %18 = arith.divf %16, %17 : vector<8x128xf32>
    %19 = math.tanh %13 : vector<8x128xf32>
    %20 = vector.extract_strided_slice %18 {offsets = [0, 0], sizes = [8, 32], strides = [1, 1]} : vector<8x128xf32> to vector<8x32xf32>
    %21 = vector.extract_strided_slice %18 {offsets = [0, 32], sizes = [8, 32], strides = [1, 1]} : vector<8x128xf32> to vector<8x32xf32>
    %22 = vector.extract_strided_slice %18 {offsets = [0, 96], sizes = [8, 32], strides = [1, 1]} : vector<8x128xf32> to vector<8x32xf32>
    %23 = vector.extract_strided_slice %19 {offsets = [0, 64], sizes = [8, 32], strides = [1, 1]} : vector<8x128xf32> to vector<8x32xf32>
    %24 = arith.mulf %21, %9 : vector<8x32xf32>
    %25 = arith.mulf %20, %23 : vector<8x32xf32>
    %26 = arith.addf %24, %25 : vector<8x32xf32>
    %27 = math.tanh %26 : vector<8x32xf32>
    %28 = arith.mulf %22, %27 : vector<8x32xf32>
    %c0_15 = arith.constant 0 : index
    %c0_16 = arith.constant 0 : index
    %29 = vector.load %arg10[%c0_15, %c0_16] : memref<64x32xf32, #tpu.memory_space<vmem>>, vector<8x32xf32>
    tpu.vector_store %arg10[%c0_15, %c0_16], %28 {strides = array<i32>} : memref<64x32xf32, #tpu.memory_space<vmem>>, vector<8x32xf32>,
    %c8 = arith.constant 8 : index
    %c0_17 = arith.constant 0 : index
    %30 = vector.load %arg9[%c8, %c0_17] : memref<64x128xf32, #tpu.memory_space<vmem>>, vector<8x128xf32>
    %31 = arith.truncf %28 : vector<8x32xf32> to vector<8x32xbf16>
    %cst_18 = arith.constant dense<0.000000e+00> : vector<8x128xf32>
    %32 = tpu.matmul %31, %7, %cst_18 {dimension_numbers = #tpu.dot_dimension_numbers<[1], [0], [0], [1], [0, 0, 1, 1], [], []>} : vector<8x32xbf16>, vector<32x128xbf16>, vector<8x128xf32> -> vector<8x128xf32>
    %33 = arith.addf %30, %32 : vector<8x128xf32>
    %34 = arith.negf %33 : vector<8x128xf32>
    %35 = math.exp %34 : vector<8x128xf32>
    %cst_19 = arith.constant 1.000000e+00 : f32
    %36 = vector.broadcast %cst_19 : f32 to vector<8x128xf32>
    %37 = arith.addf %36, %35 : vector<8x128xf32>
    %38 = arith.divf %36, %37 : vector<8x128xf32>
    %39 = math.tanh %33 : vector<8x128xf32>
    %40 = vector.extract_strided_slice %38 {offsets = [0, 0], sizes = [8, 32], strides = [1, 1]} : vector<8x128xf32> to vector<8x32xf32>
    %41 = vector.extract_strided_slice %38 {offsets = [0, 32], sizes = [8, 32], strides = [1, 1]} : vector<8x128xf32> to vector<8x32xf32>
    %42 = vector.extract_strided_slice %38 {offsets = [0, 96], sizes = [8, 32], strides = [1, 1]} : vector<8x128xf32> to vector<8x32xf32>
    %43 = vector.extract_strided_slice %39 {offsets = [0, 64], sizes = [8, 32], strides = [1, 1]} : vector<8x128xf32> to vector<8x32xf32>
    %44 = arith.mulf %41, %26 : vector<8x32xf32>
    %45 = arith.mulf %40, %43 : vector<8x32xf32>
    %46 = arith.addf %44, %45 : vector<8x32xf32>
    %47 = math.tanh %46 : vector<8x32xf32>
    %48 = arith.mulf %42, %47 : vector<8x32xf32>
    %c8_20 = arith.constant 8 : index
    %c0_21 = arith.constant 0 : index
    %49 = vector.load %arg10[%c8_20, %c0_21] : memref<64x32xf32, #tpu.memory_space<vmem>>, vector<8x32xf32>
    tpu.vector_store %arg10[%c8_20, %c0_21], %48 {strides = array<i32>} : memref<64x32xf32, #tpu.memory_space<vmem>>, vector<8x32xf32>,
    %c16 = arith.constant 16 : index
    %c0_22 = arith.constant 0 : index
    %50 = vector.load %arg9[%c16, %c0_22] : memref<64x128xf32, #tpu.memory_space<vmem>>, vector<8x128xf32>
    %51 = arith.truncf %48 : vector<8x32xf32> to vector<8x32xbf16>
    %cst_23 = arith.constant dense<0.000000e+00> : vector<8x128xf32>
    %52 = tpu.matmul %51, %7, %cst_23 {dimension_numbers = #tpu.dot_dimension_numbers<[1], [0], [0], [1], [0, 0, 1, 1], [], []>} : vector<8x32xbf16>, vector<32x128xbf16>, vector<8x128xf32> -> vector<8x128xf32>
    %53 = arith.addf %50, %52 : vector<8x128xf32>
    %54 = arith.negf %53 : vector<8x128xf32>
    %55 = math.exp %54 : vector<8x128xf32>
    %cst_24 = arith.constant 1.000000e+00 : f32
    %56 = vector.broadcast %cst_24 : f32 to vector<8x128xf32>
    %57 = arith.addf %56, %55 : vector<8x128xf32>
    %58 = arith.divf %56, %57 : vector<8x128xf32>
    %59 = math.tanh %53 : vector<8x128xf32>
    %60 = vector.extract_strided_slice %58 {offsets = [0, 0], sizes = [8, 32], strides = [1, 1]} : vector<8x128xf32> to vector<8x32xf32>
    %61 = vector.extract_strided_slice %58 {offsets = [0, 32], sizes = [8, 32], strides = [1, 1]} : vector<8x128xf32> to vector<8x32xf32>
    %62 = vector.extract_strided_slice %58 {offsets = [0, 96], sizes = [8, 32], strides = [1, 1]} : vector<8x128xf32> to vector<8x32xf32>
    %63 = vector.extract_strided_slice %59 {offsets = [0, 64], sizes = [8, 32], strides = [1, 1]} : vector<8x128xf32> to vector<8x32xf32>
    %64 = arith.mulf %61, %46 : vector<8x32xf32>
    %65 = arith.mulf %60, %63 : vector<8x32xf32>
    %66 = arith.addf %64, %65 : vector<8x32xf32>
    %67 = math.tanh %66 : vector<8x32xf32>
    %68 = arith.mulf %62, %67 : vector<8x32xf32>
    %c16_25 = arith.constant 16 : index
    %c0_26 = arith.constant 0 : index
    %69 = vector.load %arg10[%c16_25, %c0_26] : memref<64x32xf32, #tpu.memory_space<vmem>>, vector<8x32xf32>
    tpu.vector_store %arg10[%c16_25, %c0_26], %68 {strides = array<i32>} : memref<64x32xf32, #tpu.memory_space<vmem>>, vector<8x32xf32>,
    %c24 = arith.constant 24 : index
    %c0_27 = arith.constant 0 : index
    %70 = vector.load %arg9[%c24, %c0_27] : memref<64x128xf32, #tpu.memory_space<vmem>>, vector<8x128xf32>
    %71 = arith.truncf %68 : vector<8x32xf32> to vector<8x32xbf16>
    %cst_28 = arith.constant dense<0.000000e+00> : vector<8x128xf32>
    %72 = tpu.matmul %71, %7, %cst_28 {dimension_numbers = #tpu.dot_dimension_numbers<[1], [0], [0], [1], [0, 0, 1, 1], [], []>} : vector<8x32xbf16>, vector<32x128xbf16>, vector<8x128xf32> -> vector<8x128xf32>
    %73 = arith.addf %70, %72 : vector<8x128xf32>
    %74 = arith.negf %73 : vector<8x128xf32>
    %75 = math.exp %74 : vector<8x128xf32>
    %cst_29 = arith.constant 1.000000e+00 : f32
    %76 = vector.broadcast %cst_29 : f32 to vector<8x128xf32>
    %77 = arith.addf %76, %75 : vector<8x128xf32>
    %78 = arith.divf %76, %77 : vector<8x128xf32>
    %79 = math.tanh %73 : vector<8x128xf32>
    %80 = vector.extract_strided_slice %78 {offsets = [0, 0], sizes = [8, 32], strides = [1, 1]} : vector<8x128xf32> to vector<8x32xf32>
    %81 = vector.extract_strided_slice %78 {offsets = [0, 32], sizes = [8, 32], strides = [1, 1]} : vector<8x128xf32> to vector<8x32xf32>
    %82 = vector.extract_strided_slice %78 {offsets = [0, 96], sizes = [8, 32], strides = [1, 1]} : vector<8x128xf32> to vector<8x32xf32>
    %83 = vector.extract_strided_slice %79 {offsets = [0, 64], sizes = [8, 32], strides = [1, 1]} : vector<8x128xf32> to vector<8x32xf32>
    %84 = arith.mulf %81, %66 : vector<8x32xf32>
    %85 = arith.mulf %80, %83 : vector<8x32xf32>
    %86 = arith.addf %84, %85 : vector<8x32xf32>
    %87 = math.tanh %86 : vector<8x32xf32>
    %88 = arith.mulf %82, %87 : vector<8x32xf32>
    %c24_30 = arith.constant 24 : index
    %c0_31 = arith.constant 0 : index
    %89 = vector.load %arg10[%c24_30, %c0_31] : memref<64x32xf32, #tpu.memory_space<vmem>>, vector<8x32xf32>
    tpu.vector_store %arg10[%c24_30, %c0_31], %88 {strides = array<i32>} : memref<64x32xf32, #tpu.memory_space<vmem>>, vector<8x32xf32>,
    %c32 = arith.constant 32 : index
    %c0_32 = arith.constant 0 : index
    %90 = vector.load %arg9[%c32, %c0_32] : memref<64x128xf32, #tpu.memory_space<vmem>>, vector<8x128xf32>
    %91 = arith.truncf %88 : vector<8x32xf32> to vector<8x32xbf16>
    %cst_33 = arith.constant dense<0.000000e+00> : vector<8x128xf32>
    %92 = tpu.matmul %91, %7, %cst_33 {dimension_numbers = #tpu.dot_dimension_numbers<[1], [0], [0], [1], [0, 0, 1, 1], [], []>} : vector<8x32xbf16>, vector<32x128xbf16>, vector<8x128xf32> -> vector<8x128xf32>
    %93 = arith.addf %90, %92 : vector<8x128xf32>
    %94 = arith.negf %93 : vector<8x128xf32>
    %95 = math.exp %94 : vector<8x128xf32>
    %cst_34 = arith.constant 1.000000e+00 : f32
    %96 = vector.broadcast %cst_34 : f32 to vector<8x128xf32>
    %97 = arith.addf %96, %95 : vector<8x128xf32>
    %98 = arith.divf %96, %97 : vector<8x128xf32>
    %99 = math.tanh %93 : vector<8x128xf32>
    %100 = vector.extract_strided_slice %98 {offsets = [0, 0], sizes = [8, 32], strides = [1, 1]} : vector<8x128xf32> to vector<8x32xf32>
    %101 = vector.extract_strided_slice %98 {offsets = [0, 32], sizes = [8, 32], strides = [1, 1]} : vector<8x128xf32> to vector<8x32xf32>
    %102 = vector.extract_strided_slice %98 {offsets = [0, 96], sizes = [8, 32], strides = [1, 1]} : vector<8x128xf32> to vector<8x32xf32>
    %103 = vector.extract_strided_slice %99 {offsets = [0, 64], sizes = [8, 32], strides = [1, 1]} : vector<8x128xf32> to vector<8x32xf32>
    %104 = arith.mulf %101, %86 : vector<8x32xf32>
    %105 = arith.mulf %100, %103 : vector<8x32xf32>
    %106 = arith.addf %104, %105 : vector<8x32xf32>
    %107 = math.tanh %106 : vector<8x32xf32>
    %108 = arith.mulf %102, %107 : vector<8x32xf32>
    %c32_35 = arith.constant 32 : index
    %c0_36 = arith.constant 0 : index
    %109 = vector.load %arg10[%c32_35, %c0_36] : memref<64x32xf32, #tpu.memory_space<vmem>>, vector<8x32xf32>
    tpu.vector_store %arg10[%c32_35, %c0_36], %108 {strides = array<i32>} : memref<64x32xf32, #tpu.memory_space<vmem>>, vector<8x32xf32>,
    %c40 = arith.constant 40 : index
    %c0_37 = arith.constant 0 : index
    %110 = vector.load %arg9[%c40, %c0_37] : memref<64x128xf32, #tpu.memory_space<vmem>>, vector<8x128xf32>
    %111 = arith.truncf %108 : vector<8x32xf32> to vector<8x32xbf16>
    %cst_38 = arith.constant dense<0.000000e+00> : vector<8x128xf32>
    %112 = tpu.matmul %111, %7, %cst_38 {dimension_numbers = #tpu.dot_dimension_numbers<[1], [0], [0], [1], [0, 0, 1, 1], [], []>} : vector<8x32xbf16>, vector<32x128xbf16>, vector<8x128xf32> -> vector<8x128xf32>
    %113 = arith.addf %110, %112 : vector<8x128xf32>
    %114 = arith.negf %113 : vector<8x128xf32>
    %115 = math.exp %114 : vector<8x128xf32>
    %cst_39 = arith.constant 1.000000e+00 : f32
    %116 = vector.broadcast %cst_39 : f32 to vector<8x128xf32>
    %117 = arith.addf %116, %115 : vector<8x128xf32>
    %118 = arith.divf %116, %117 : vector<8x128xf32>
    %119 = math.tanh %113 : vector<8x128xf32>
    %120 = vector.extract_strided_slice %118 {offsets = [0, 0], sizes = [8, 32], strides = [1, 1]} : vector<8x128xf32> to vector<8x32xf32>
    %121 = vector.extract_strided_slice %118 {offsets = [0, 32], sizes = [8, 32], strides = [1, 1]} : vector<8x128xf32> to vector<8x32xf32>
    %122 = vector.extract_strided_slice %118 {offsets = [0, 96], sizes = [8, 32], strides = [1, 1]} : vector<8x128xf32> to vector<8x32xf32>
    %123 = vector.extract_strided_slice %119 {offsets = [0, 64], sizes = [8, 32], strides = [1, 1]} : vector<8x128xf32> to vector<8x32xf32>
    %124 = arith.mulf %121, %106 : vector<8x32xf32>
    %125 = arith.mulf %120, %123 : vector<8x32xf32>
    %126 = arith.addf %124, %125 : vector<8x32xf32>
    %127 = math.tanh %126 : vector<8x32xf32>
    %128 = arith.mulf %122, %127 : vector<8x32xf32>
    %c40_40 = arith.constant 40 : index
    %c0_41 = arith.constant 0 : index
    %129 = vector.load %arg10[%c40_40, %c0_41] : memref<64x32xf32, #tpu.memory_space<vmem>>, vector<8x32xf32>
    tpu.vector_store %arg10[%c40_40, %c0_41], %128 {strides = array<i32>} : memref<64x32xf32, #tpu.memory_space<vmem>>, vector<8x32xf32>,
    %c48 = arith.constant 48 : index
    %c0_42 = arith.constant 0 : index
    %130 = vector.load %arg9[%c48, %c0_42] : memref<64x128xf32, #tpu.memory_space<vmem>>, vector<8x128xf32>
    %131 = arith.truncf %128 : vector<8x32xf32> to vector<8x32xbf16>
    %cst_43 = arith.constant dense<0.000000e+00> : vector<8x128xf32>
    %132 = tpu.matmul %131, %7, %cst_43 {dimension_numbers = #tpu.dot_dimension_numbers<[1], [0], [0], [1], [0, 0, 1, 1], [], []>} : vector<8x32xbf16>, vector<32x128xbf16>, vector<8x128xf32> -> vector<8x128xf32>
    %133 = arith.addf %130, %132 : vector<8x128xf32>
    %134 = arith.negf %133 : vector<8x128xf32>
    %135 = math.exp %134 : vector<8x128xf32>
    %cst_44 = arith.constant 1.000000e+00 : f32
    %136 = vector.broadcast %cst_44 : f32 to vector<8x128xf32>
    %137 = arith.addf %136, %135 : vector<8x128xf32>
    %138 = arith.divf %136, %137 : vector<8x128xf32>
    %139 = math.tanh %133 : vector<8x128xf32>
    %140 = vector.extract_strided_slice %138 {offsets = [0, 0], sizes = [8, 32], strides = [1, 1]} : vector<8x128xf32> to vector<8x32xf32>
    %141 = vector.extract_strided_slice %138 {offsets = [0, 32], sizes = [8, 32], strides = [1, 1]} : vector<8x128xf32> to vector<8x32xf32>
    %142 = vector.extract_strided_slice %138 {offsets = [0, 96], sizes = [8, 32], strides = [1, 1]} : vector<8x128xf32> to vector<8x32xf32>
    %143 = vector.extract_strided_slice %139 {offsets = [0, 64], sizes = [8, 32], strides = [1, 1]} : vector<8x128xf32> to vector<8x32xf32>
    %144 = arith.mulf %141, %126 : vector<8x32xf32>
    %145 = arith.mulf %140, %143 : vector<8x32xf32>
    %146 = arith.addf %144, %145 : vector<8x32xf32>
    %147 = math.tanh %146 : vector<8x32xf32>
    %148 = arith.mulf %142, %147 : vector<8x32xf32>
    %c48_45 = arith.constant 48 : index
    %c0_46 = arith.constant 0 : index
    %149 = vector.load %arg10[%c48_45, %c0_46] : memref<64x32xf32, #tpu.memory_space<vmem>>, vector<8x32xf32>
    tpu.vector_store %arg10[%c48_45, %c0_46], %148 {strides = array<i32>} : memref<64x32xf32, #tpu.memory_space<vmem>>, vector<8x32xf32>,
    %c56 = arith.constant 56 : index
    %c0_47 = arith.constant 0 : index
    %150 = vector.load %arg9[%c56, %c0_47] : memref<64x128xf32, #tpu.memory_space<vmem>>, vector<8x128xf32>
    %151 = arith.truncf %148 : vector<8x32xf32> to vector<8x32xbf16>
    %cst_48 = arith.constant dense<0.000000e+00> : vector<8x128xf32>
    %152 = tpu.matmul %151, %7, %cst_48 {dimension_numbers = #tpu.dot_dimension_numbers<[1], [0], [0], [1], [0, 0, 1, 1], [], []>} : vector<8x32xbf16>, vector<32x128xbf16>, vector<8x128xf32> -> vector<8x128xf32>
    %153 = arith.addf %150, %152 : vector<8x128xf32>
    %154 = arith.negf %153 : vector<8x128xf32>
    %155 = math.exp %154 : vector<8x128xf32>
    %cst_49 = arith.constant 1.000000e+00 : f32
    %156 = vector.broadcast %cst_49 : f32 to vector<8x128xf32>
    %157 = arith.addf %156, %155 : vector<8x128xf32>
    %158 = arith.divf %156, %157 : vector<8x128xf32>
    %159 = math.tanh %153 : vector<8x128xf32>
    %160 = vector.extract_strided_slice %158 {offsets = [0, 0], sizes = [8, 32], strides = [1, 1]} : vector<8x128xf32> to vector<8x32xf32>
    %161 = vector.extract_strided_slice %158 {offsets = [0, 32], sizes = [8, 32], strides = [1, 1]} : vector<8x128xf32> to vector<8x32xf32>
    %162 = vector.extract_strided_slice %158 {offsets = [0, 96], sizes = [8, 32], strides = [1, 1]} : vector<8x128xf32> to vector<8x32xf32>
    %163 = vector.extract_strided_slice %159 {offsets = [0, 64], sizes = [8, 32], strides = [1, 1]} : vector<8x128xf32> to vector<8x32xf32>
    %164 = arith.mulf %161, %146 : vector<8x32xf32>
    %165 = arith.mulf %160, %163 : vector<8x32xf32>
    %166 = arith.addf %164, %165 : vector<8x32xf32>
    %167 = math.tanh %166 : vector<8x32xf32>
    %168 = arith.mulf %162, %167 : vector<8x32xf32>
    %c56_50 = arith.constant 56 : index
    %c0_51 = arith.constant 0 : index
    %169 = vector.load %arg10[%c56_50, %c0_51] : memref<64x32xf32, #tpu.memory_space<vmem>>, vector<8x32xf32>
    tpu.vector_store %arg10[%c56_50, %c0_51], %168 {strides = array<i32>} : memref<64x32xf32, #tpu.memory_space<vmem>>, vector<8x32xf32>,
    %c0_52 = arith.constant 0 : index
    %c0_53 = arith.constant 0 : index
    %170 = vector.load %arg10[%c0_52, %c0_53] : memref<64x32xf32, #tpu.memory_space<vmem>>, vector<64x32xf32>
    %c0_54 = arith.constant 0 : index
    %c0_55 = arith.constant 0 : index
    %171 = vector.load %arg3[%c0_54, %c0_55] : memref<32x128xf32, #tpu.memory_space<vmem>>, vector<32x128xf32>
    %cst_56 = arith.constant dense<0.000000e+00> : vector<64x128xf32>
    %172 = tpu.matmul %170, %171, %cst_56 {dimension_numbers = #tpu.dot_dimension_numbers<[1], [0], [0], [1], [0, 0, 1, 1], [], []>} : vector<64x32xf32>, vector<32x128xf32>, vector<64x128xf32> -> vector<64x128xf32>
    %c1 = arith.constant 1 : index
    %c0_57 = arith.constant 0 : index
    %173 = vector.load %arg5[%c1, %c0_57] : memref<2x128xf32, #tpu.memory_space<vmem>>, vector<1x128xf32>
    %174 = vector.broadcast %173 : vector<1x128xf32> to vector<64x128xf32>
    %175 = arith.addf %172, %174 : vector<64x128xf32>
    %c0_58 = arith.constant 0 : index
    %c0_59 = arith.constant 0 : index
    %176 = vector.load %arg9[%c0_58, %c0_59] : memref<64x128xf32, #tpu.memory_space<vmem>>, vector<64x128xf32>
    tpu.vector_store %arg9[%c0_58, %c0_59], %175 {strides = array<i32>} : memref<64x128xf32, #tpu.memory_space<vmem>>, vector<64x128xf32>,
    %c0_60 = arith.constant 0 : index
    %c0_61 = arith.constant 0 : index
    %177 = vector.load %arg4[%c0_60, %c0_61] : memref<32x128xbf16, #tpu.memory_space<vmem>>, vector<32x128xbf16>
    %cst_62 = arith.constant 0.000000e+00 : f32
    %178 = vector.broadcast %cst_62 : f32 to vector<8x32xf32>
    %cst_63 = arith.constant 0.000000e+00 : f32
    %179 = vector.broadcast %cst_63 : f32 to vector<8x32xf32>
    %c0_64 = arith.constant 0 : index
    %c0_65 = arith.constant 0 : index
    %180 = vector.load %arg9[%c0_64, %c0_65] : memref<64x128xf32, #tpu.memory_space<vmem>>, vector<8x128xf32>
    %181 = arith.truncf %178 : vector<8x32xf32> to vector<8x32xbf16>
    %cst_66 = arith.constant dense<0.000000e+00> : vector<8x128xf32>
    %182 = tpu.matmul %181, %177, %cst_66 {dimension_numbers = #tpu.dot_dimension_numbers<[1], [0], [0], [1], [0, 0, 1, 1], [], []>} : vector<8x32xbf16>, vector<32x128xbf16>, vector<8x128xf32> -> vector<8x128xf32>
    %183 = arith.addf %180, %182 : vector<8x128xf32>
    %184 = arith.negf %183 : vector<8x128xf32>
    %185 = math.exp %184 : vector<8x128xf32>
    %cst_67 = arith.constant 1.000000e+00 : f32
    %186 = vector.broadcast %cst_67 : f32 to vector<8x128xf32>
    %187 = arith.addf %186, %185 : vector<8x128xf32>
    %188 = arith.divf %186, %187 : vector<8x128xf32>
    %189 = math.tanh %183 : vector<8x128xf32>
    %190 = vector.extract_strided_slice %188 {offsets = [0, 0], sizes = [8, 32], strides = [1, 1]} : vector<8x128xf32> to vector<8x32xf32>
    %191 = vector.extract_strided_slice %188 {offsets = [0, 32], sizes = [8, 32], strides = [1, 1]} : vector<8x128xf32> to vector<8x32xf32>
    %192 = vector.extract_strided_slice %188 {offsets = [0, 96], sizes = [8, 32], strides = [1, 1]} : vector<8x128xf32> to vector<8x32xf32>
    %193 = vector.extract_strided_slice %189 {offsets = [0, 64], sizes = [8, 32], strides = [1, 1]} : vector<8x128xf32> to vector<8x32xf32>
    %194 = arith.mulf %191, %179 : vector<8x32xf32>
    %195 = arith.mulf %190, %193 : vector<8x32xf32>
    %196 = arith.addf %194, %195 : vector<8x32xf32>
    %197 = math.tanh %196 : vector<8x32xf32>
    %198 = arith.mulf %192, %197 : vector<8x32xf32>
    %c8_68 = arith.constant 8 : index
    %c0_69 = arith.constant 0 : index
    %199 = vector.load %arg9[%c8_68, %c0_69] : memref<64x128xf32, #tpu.memory_space<vmem>>, vector<8x128xf32>
    %200 = arith.truncf %198 : vector<8x32xf32> to vector<8x32xbf16>
    %cst_70 = arith.constant dense<0.000000e+00> : vector<8x128xf32>
    %201 = tpu.matmul %200, %177, %cst_70 {dimension_numbers = #tpu.dot_dimension_numbers<[1], [0], [0], [1], [0, 0, 1, 1], [], []>} : vector<8x32xbf16>, vector<32x128xbf16>, vector<8x128xf32> -> vector<8x128xf32>
    %202 = arith.addf %199, %201 : vector<8x128xf32>
    %203 = arith.negf %202 : vector<8x128xf32>
    %204 = math.exp %203 : vector<8x128xf32>
    %cst_71 = arith.constant 1.000000e+00 : f32
    %205 = vector.broadcast %cst_71 : f32 to vector<8x128xf32>
    %206 = arith.addf %205, %204 : vector<8x128xf32>
    %207 = arith.divf %205, %206 : vector<8x128xf32>
    %208 = math.tanh %202 : vector<8x128xf32>
    %209 = vector.extract_strided_slice %207 {offsets = [0, 0], sizes = [8, 32], strides = [1, 1]} : vector<8x128xf32> to vector<8x32xf32>
    %210 = vector.extract_strided_slice %207 {offsets = [0, 32], sizes = [8, 32], strides = [1, 1]} : vector<8x128xf32> to vector<8x32xf32>
    %211 = vector.extract_strided_slice %207 {offsets = [0, 96], sizes = [8, 32], strides = [1, 1]} : vector<8x128xf32> to vector<8x32xf32>
    %212 = vector.extract_strided_slice %208 {offsets = [0, 64], sizes = [8, 32], strides = [1, 1]} : vector<8x128xf32> to vector<8x32xf32>
    %213 = arith.mulf %210, %196 : vector<8x32xf32>
    %214 = arith.mulf %209, %212 : vector<8x32xf32>
    %215 = arith.addf %213, %214 : vector<8x32xf32>
    %216 = math.tanh %215 : vector<8x32xf32>
    %217 = arith.mulf %211, %216 : vector<8x32xf32>
    %c16_72 = arith.constant 16 : index
    %c0_73 = arith.constant 0 : index
    %218 = vector.load %arg9[%c16_72, %c0_73] : memref<64x128xf32, #tpu.memory_space<vmem>>, vector<8x128xf32>
    %219 = arith.truncf %217 : vector<8x32xf32> to vector<8x32xbf16>
    %cst_74 = arith.constant dense<0.000000e+00> : vector<8x128xf32>
    %220 = tpu.matmul %219, %177, %cst_74 {dimension_numbers = #tpu.dot_dimension_numbers<[1], [0], [0], [1], [0, 0, 1, 1], [], []>} : vector<8x32xbf16>, vector<32x128xbf16>, vector<8x128xf32> -> vector<8x128xf32>
    %221 = arith.addf %218, %220 : vector<8x128xf32>
    %222 = arith.negf %221 : vector<8x128xf32>
    %223 = math.exp %222 : vector<8x128xf32>
    %cst_75 = arith.constant 1.000000e+00 : f32
    %224 = vector.broadcast %cst_75 : f32 to vector<8x128xf32>
    %225 = arith.addf %224, %223 : vector<8x128xf32>
    %226 = arith.divf %224, %225 : vector<8x128xf32>
    %227 = math.tanh %221 : vector<8x128xf32>
    %228 = vector.extract_strided_slice %226 {offsets = [0, 0], sizes = [8, 32], strides = [1, 1]} : vector<8x128xf32> to vector<8x32xf32>
    %229 = vector.extract_strided_slice %226 {offsets = [0, 32], sizes = [8, 32], strides = [1, 1]} : vector<8x128xf32> to vector<8x32xf32>
    %230 = vector.extract_strided_slice %226 {offsets = [0, 96], sizes = [8, 32], strides = [1, 1]} : vector<8x128xf32> to vector<8x32xf32>
    %231 = vector.extract_strided_slice %227 {offsets = [0, 64], sizes = [8, 32], strides = [1, 1]} : vector<8x128xf32> to vector<8x32xf32>
    %232 = arith.mulf %229, %215 : vector<8x32xf32>
    %233 = arith.mulf %228, %231 : vector<8x32xf32>
    %234 = arith.addf %232, %233 : vector<8x32xf32>
    %235 = math.tanh %234 : vector<8x32xf32>
    %236 = arith.mulf %230, %235 : vector<8x32xf32>
    %c24_76 = arith.constant 24 : index
    %c0_77 = arith.constant 0 : index
    %237 = vector.load %arg9[%c24_76, %c0_77] : memref<64x128xf32, #tpu.memory_space<vmem>>, vector<8x128xf32>
    %238 = arith.truncf %236 : vector<8x32xf32> to vector<8x32xbf16>
    %cst_78 = arith.constant dense<0.000000e+00> : vector<8x128xf32>
    %239 = tpu.matmul %238, %177, %cst_78 {dimension_numbers = #tpu.dot_dimension_numbers<[1], [0], [0], [1], [0, 0, 1, 1], [], []>} : vector<8x32xbf16>, vector<32x128xbf16>, vector<8x128xf32> -> vector<8x128xf32>
    %240 = arith.addf %237, %239 : vector<8x128xf32>
    %241 = arith.negf %240 : vector<8x128xf32>
    %242 = math.exp %241 : vector<8x128xf32>
    %cst_79 = arith.constant 1.000000e+00 : f32
    %243 = vector.broadcast %cst_79 : f32 to vector<8x128xf32>
    %244 = arith.addf %243, %242 : vector<8x128xf32>
    %245 = arith.divf %243, %244 : vector<8x128xf32>
    %246 = math.tanh %240 : vector<8x128xf32>
    %247 = vector.extract_strided_slice %245 {offsets = [0, 0], sizes = [8, 32], strides = [1, 1]} : vector<8x128xf32> to vector<8x32xf32>
    %248 = vector.extract_strided_slice %245 {offsets = [0, 32], sizes = [8, 32], strides = [1, 1]} : vector<8x128xf32> to vector<8x32xf32>
    %249 = vector.extract_strided_slice %245 {offsets = [0, 96], sizes = [8, 32], strides = [1, 1]} : vector<8x128xf32> to vector<8x32xf32>
    %250 = vector.extract_strided_slice %246 {offsets = [0, 64], sizes = [8, 32], strides = [1, 1]} : vector<8x128xf32> to vector<8x32xf32>
    %251 = arith.mulf %248, %234 : vector<8x32xf32>
    %252 = arith.mulf %247, %250 : vector<8x32xf32>
    %253 = arith.addf %251, %252 : vector<8x32xf32>
    %254 = math.tanh %253 : vector<8x32xf32>
    %255 = arith.mulf %249, %254 : vector<8x32xf32>
    %c32_80 = arith.constant 32 : index
    %c0_81 = arith.constant 0 : index
    %256 = vector.load %arg9[%c32_80, %c0_81] : memref<64x128xf32, #tpu.memory_space<vmem>>, vector<8x128xf32>
    %257 = arith.truncf %255 : vector<8x32xf32> to vector<8x32xbf16>
    %cst_82 = arith.constant dense<0.000000e+00> : vector<8x128xf32>
    %258 = tpu.matmul %257, %177, %cst_82 {dimension_numbers = #tpu.dot_dimension_numbers<[1], [0], [0], [1], [0, 0, 1, 1], [], []>} : vector<8x32xbf16>, vector<32x128xbf16>, vector<8x128xf32> -> vector<8x128xf32>
    %259 = arith.addf %256, %258 : vector<8x128xf32>
    %260 = arith.negf %259 : vector<8x128xf32>
    %261 = math.exp %260 : vector<8x128xf32>
    %cst_83 = arith.constant 1.000000e+00 : f32
    %262 = vector.broadcast %cst_83 : f32 to vector<8x128xf32>
    %263 = arith.addf %262, %261 : vector<8x128xf32>
    %264 = arith.divf %262, %263 : vector<8x128xf32>
    %265 = math.tanh %259 : vector<8x128xf32>
    %266 = vector.extract_strided_slice %264 {offsets = [0, 0], sizes = [8, 32], strides = [1, 1]} : vector<8x128xf32> to vector<8x32xf32>
    %267 = vector.extract_strided_slice %264 {offsets = [0, 32], sizes = [8, 32], strides = [1, 1]} : vector<8x128xf32> to vector<8x32xf32>
    %268 = vector.extract_strided_slice %264 {offsets = [0, 96], sizes = [8, 32], strides = [1, 1]} : vector<8x128xf32> to vector<8x32xf32>
    %269 = vector.extract_strided_slice %265 {offsets = [0, 64], sizes = [8, 32], strides = [1, 1]} : vector<8x128xf32> to vector<8x32xf32>
    %270 = arith.mulf %267, %253 : vector<8x32xf32>
    %271 = arith.mulf %266, %269 : vector<8x32xf32>
    %272 = arith.addf %270, %271 : vector<8x32xf32>
    %273 = math.tanh %272 : vector<8x32xf32>
    %274 = arith.mulf %268, %273 : vector<8x32xf32>
    %c40_84 = arith.constant 40 : index
    %c0_85 = arith.constant 0 : index
    %275 = vector.load %arg9[%c40_84, %c0_85] : memref<64x128xf32, #tpu.memory_space<vmem>>, vector<8x128xf32>
    %276 = arith.truncf %274 : vector<8x32xf32> to vector<8x32xbf16>
    %cst_86 = arith.constant dense<0.000000e+00> : vector<8x128xf32>
    %277 = tpu.matmul %276, %177, %cst_86 {dimension_numbers = #tpu.dot_dimension_numbers<[1], [0], [0], [1], [0, 0, 1, 1], [], []>} : vector<8x32xbf16>, vector<32x128xbf16>, vector<8x128xf32> -> vector<8x128xf32>
    %278 = arith.addf %275, %277 : vector<8x128xf32>
    %279 = arith.negf %278 : vector<8x128xf32>
    %280 = math.exp %279 : vector<8x128xf32>
    %cst_87 = arith.constant 1.000000e+00 : f32
    %281 = vector.broadcast %cst_87 : f32 to vector<8x128xf32>
    %282 = arith.addf %281, %280 : vector<8x128xf32>
    %283 = arith.divf %281, %282 : vector<8x128xf32>
    %284 = math.tanh %278 : vector<8x128xf32>
    %285 = vector.extract_strided_slice %283 {offsets = [0, 0], sizes = [8, 32], strides = [1, 1]} : vector<8x128xf32> to vector<8x32xf32>
    %286 = vector.extract_strided_slice %283 {offsets = [0, 32], sizes = [8, 32], strides = [1, 1]} : vector<8x128xf32> to vector<8x32xf32>
    %287 = vector.extract_strided_slice %283 {offsets = [0, 96], sizes = [8, 32], strides = [1, 1]} : vector<8x128xf32> to vector<8x32xf32>
    %288 = vector.extract_strided_slice %284 {offsets = [0, 64], sizes = [8, 32], strides = [1, 1]} : vector<8x128xf32> to vector<8x32xf32>
    %289 = arith.mulf %286, %272 : vector<8x32xf32>
    %290 = arith.mulf %285, %288 : vector<8x32xf32>
    %291 = arith.addf %289, %290 : vector<8x32xf32>
    %292 = math.tanh %291 : vector<8x32xf32>
    %293 = arith.mulf %287, %292 : vector<8x32xf32>
    %c48_88 = arith.constant 48 : index
    %c0_89 = arith.constant 0 : index
    %294 = vector.load %arg9[%c48_88, %c0_89] : memref<64x128xf32, #tpu.memory_space<vmem>>, vector<8x128xf32>
    %295 = arith.truncf %293 : vector<8x32xf32> to vector<8x32xbf16>
    %cst_90 = arith.constant dense<0.000000e+00> : vector<8x128xf32>
    %296 = tpu.matmul %295, %177, %cst_90 {dimension_numbers = #tpu.dot_dimension_numbers<[1], [0], [0], [1], [0, 0, 1, 1], [], []>} : vector<8x32xbf16>, vector<32x128xbf16>, vector<8x128xf32> -> vector<8x128xf32>
    %297 = arith.addf %294, %296 : vector<8x128xf32>
    %298 = arith.negf %297 : vector<8x128xf32>
    %299 = math.exp %298 : vector<8x128xf32>
    %cst_91 = arith.constant 1.000000e+00 : f32
    %300 = vector.broadcast %cst_91 : f32 to vector<8x128xf32>
    %301 = arith.addf %300, %299 : vector<8x128xf32>
    %302 = arith.divf %300, %301 : vector<8x128xf32>
    %303 = math.tanh %297 : vector<8x128xf32>
    %304 = vector.extract_strided_slice %302 {offsets = [0, 0], sizes = [8, 32], strides = [1, 1]} : vector<8x128xf32> to vector<8x32xf32>
    %305 = vector.extract_strided_slice %302 {offsets = [0, 32], sizes = [8, 32], strides = [1, 1]} : vector<8x128xf32> to vector<8x32xf32>
    %306 = vector.extract_strided_slice %302 {offsets = [0, 96], sizes = [8, 32], strides = [1, 1]} : vector<8x128xf32> to vector<8x32xf32>
    %307 = vector.extract_strided_slice %303 {offsets = [0, 64], sizes = [8, 32], strides = [1, 1]} : vector<8x128xf32> to vector<8x32xf32>
    %308 = arith.mulf %305, %291 : vector<8x32xf32>
    %309 = arith.mulf %304, %307 : vector<8x32xf32>
    %310 = arith.addf %308, %309 : vector<8x32xf32>
    %311 = math.tanh %310 : vector<8x32xf32>
    %312 = arith.mulf %306, %311 : vector<8x32xf32>
    %c56_92 = arith.constant 56 : index
    %c0_93 = arith.constant 0 : index
    %313 = vector.load %arg9[%c56_92, %c0_93] : memref<64x128xf32, #tpu.memory_space<vmem>>, vector<8x128xf32>
    %314 = arith.truncf %312 : vector<8x32xf32> to vector<8x32xbf16>
    %cst_94 = arith.constant dense<0.000000e+00> : vector<8x128xf32>
    %315 = tpu.matmul %314, %177, %cst_94 {dimension_numbers = #tpu.dot_dimension_numbers<[1], [0], [0], [1], [0, 0, 1, 1], [], []>} : vector<8x32xbf16>, vector<32x128xbf16>, vector<8x128xf32> -> vector<8x128xf32>
    %316 = arith.addf %313, %315 : vector<8x128xf32>
    %317 = arith.negf %316 : vector<8x128xf32>
    %318 = math.exp %317 : vector<8x128xf32>
    %cst_95 = arith.constant 1.000000e+00 : f32
    %319 = vector.broadcast %cst_95 : f32 to vector<8x128xf32>
    %320 = arith.addf %319, %318 : vector<8x128xf32>
    %321 = arith.divf %319, %320 : vector<8x128xf32>
    %322 = math.tanh %316 : vector<8x128xf32>
    %323 = vector.extract_strided_slice %321 {offsets = [0, 0], sizes = [8, 32], strides = [1, 1]} : vector<8x128xf32> to vector<8x32xf32>
    %324 = vector.extract_strided_slice %321 {offsets = [0, 32], sizes = [8, 32], strides = [1, 1]} : vector<8x128xf32> to vector<8x32xf32>
    %325 = vector.extract_strided_slice %321 {offsets = [0, 96], sizes = [8, 32], strides = [1, 1]} : vector<8x128xf32> to vector<8x32xf32>
    %326 = vector.extract_strided_slice %322 {offsets = [0, 64], sizes = [8, 32], strides = [1, 1]} : vector<8x128xf32> to vector<8x32xf32>
    %327 = arith.mulf %324, %310 : vector<8x32xf32>
    %328 = arith.mulf %323, %326 : vector<8x32xf32>
    %329 = arith.addf %327, %328 : vector<8x32xf32>
    %330 = math.tanh %329 : vector<8x32xf32>
    %331 = arith.mulf %325, %330 : vector<8x32xf32>
    %c0_96 = arith.constant 0 : index
    %c0_97 = arith.constant 0 : index
    %332 = vector.load %arg6[%c0_96, %c0_97] : memref<32x16xf32, #tpu.memory_space<vmem>>, vector<32x16xf32>
    %cst_98 = arith.constant dense<0.000000e+00> : vector<8x16xf32>
    %333 = tpu.matmul %331, %332, %cst_98 {dimension_numbers = #tpu.dot_dimension_numbers<[1], [0], [0], [1], [0, 0, 1, 1], [], []>} : vector<8x32xf32>, vector<32x16xf32>, vector<8x16xf32> -> vector<8x16xf32>
    %c0_99 = arith.constant 0 : index
    %c0_100 = arith.constant 0 : index
    %334 = vector.load %arg7[%c0_99, %c0_100] : memref<3x16xf32, #tpu.memory_space<vmem>>, vector<1x16xf32>
    %335 = vector.broadcast %334 : vector<1x16xf32> to vector<8x16xf32>
    %336 = arith.addf %333, %335 : vector<8x16xf32>
    %cst_101 = arith.constant 0.000000e+00 : f32
    %337 = vector.broadcast %cst_101 : f32 to vector<8x16xf32>
    %338 = arith.maximumf %336, %337 : vector<8x16xf32>
    %c1_102 = arith.constant 1 : index
    %c0_103 = arith.constant 0 : index
    %339 = vector.load %arg7[%c1_102, %c0_103] : memref<3x16xf32, #tpu.memory_space<vmem>>, vector<1x16xf32>
    %340 = vector.broadcast %339 : vector<1x16xf32> to vector<8x16xf32>
    %341 = arith.mulf %338, %340 : vector<8x16xf32>
    %cst_104 = arith.constant dense<0.000000e+00> : vector<8xf32>
    %342 = vector.multi_reduction <add>, %341, %cst_104 [1] : vector<8x16xf32> to vector<8xf32>
    %343 = vector.shape_cast %342 : vector<8xf32> to vector<8x1xf32>
    %c2 = arith.constant 2 : index
    %c0_105 = arith.constant 0 : index
    %344 = vector.load %arg7[%c2, %c0_105] : memref<3x16xf32, #tpu.memory_space<vmem>>, vector<1x1xf32>
    %345 = vector.broadcast %344 : vector<1x1xf32> to vector<8x1xf32>
    %346 = arith.addf %343, %345 : vector<8x1xf32>
    %c0_106 = arith.constant 0 : index
    %c0_107 = arith.constant 0 : index
    %347 = vector.load %arg8[%c0_106, %c0_107] : memref<8x1xf32, #tpu.memory_space<vmem>>, vector<8x1xf32>
    tpu.vector_store %arg8[%c0_106, %c0_107], %346 {strides = array<i32>} : memref<8x1xf32, #tpu.memory_space<vmem>>, vector<8x1xf32>,
    return
  }
}

</mosaic_0001>

<llo_original>
// kernel: tpu_custom_call.1
$region0: #{tpu_custom_call.1}
  #allocation0 [shape = 'u32[]', space=smem, size = 0x4, offset = 0x4, fixed_abs, tag = 'smem constant byte address 0x4 - core index']
  #allocation1 [shape = 'u32[144,128]{1,0:T(1,128)}', space=vmem, size = 0x12000, scoped, tag = 'internal scratch']
  #allocation2 [shape = 'f32[64,128]{1,0:T(8,128)}', space=vmem, size = 0x8000, scoped, tag = 'scratch operand']
  #allocation3 [shape = 'f32[64,32]{1,0:T(8,128)}', space=vmem, size = 0x8000, scoped, tag = 'scratch operand']
  %s0 = inlined_call_operand.vmem [shape: f32[64,16], index: 0, kind: input, shape index: {}]
  %s1 = inlined_call_operand.vmem [shape: f32[16,128], index: 1, kind: input, shape index: {}]
  %s2 = inlined_call_operand.vmem [shape: bf16[32,128], index: 2, kind: input, shape index: {}]
  %s3 = inlined_call_operand.vmem [shape: f32[32,128], index: 3, kind: input, shape index: {}]
  %s4 = inlined_call_operand.vmem [shape: bf16[32,128], index: 4, kind: input, shape index: {}]
  %s5 = inlined_call_operand.vmem [shape: f32[2,128], index: 5, kind: input, shape index: {}]
  %s6 = inlined_call_operand.vmem [shape: f32[32,16], index: 6, kind: input, shape index: {}]
  %s7 = inlined_call_operand.vmem [shape: f32[3,16], index: 7, kind: input, shape index: {}]
  %s8 = inlined_call_operand.vmem [shape: f32[8,1], index: 8, kind: output, shape index: {}]
  %s9 = sld [smem:[#allocation0]]
  $region42: #{tpu_custom_call.1} parent=0
    _
  %s11 = ssub.s32 1, %s9
  %s12 = scalar_select 0, %s11, %s9
  // Predicated region
  $region2: #{tpu_custom_call.1} parent=0 // pred_check
    _
  $region3: #{tpu_custom_call.1} parent=0 // pred_check_branch
    %14 = sbr.rel (0) target = $region5
  $region4: #{tpu_custom_call.1} parent=0 // pred_region
    _
  $region5: #{tpu_custom_call.1} parent=0 // pred_fallthru
    _
  // Predicated region
  $region6: #{tpu_custom_call.1} parent=0 // pred_check
    _
  $region7: #{tpu_custom_call.1} parent=0 // pred_check_branch
    %16 = sbr.rel (0) target = $region9
  $region8: #{tpu_custom_call.1} parent=0 // pred_region
    _
  $region9: #{tpu_custom_call.1} parent=0 // pred_fallthru
    _
  // Predicated region
  $region10: #{tpu_custom_call.1} parent=0 // pred_check
    _
  $region11: #{tpu_custom_call.1} parent=0 // pred_check_branch
    %18 = sbr.rel (0) target = $region13
  $region12: #{tpu_custom_call.1} parent=0 // pred_region
    _
  $region13: #{tpu_custom_call.1} parent=0 // pred_fallthru
    _
  // Predicated region
  $region14: #{tpu_custom_call.1} parent=0 // pred_check
    _
  $region15: #{tpu_custom_call.1} parent=0 // pred_check_branch
    %20 = sbr.rel (0) target = $region17
  $region16: #{tpu_custom_call.1} parent=0 // pred_region
    _
  $region17: #{tpu_custom_call.1} parent=0 // pred_fallthru
    _
  // Predicated region
  $region18: #{tpu_custom_call.1} parent=0 // pred_check
    _
  $region19: #{tpu_custom_call.1} parent=0 // pred_check_branch
    %22 = sbr.rel (0) target = $region21
  $region20: #{tpu_custom_call.1} parent=0 // pred_region
    _
  $region21: #{tpu_custom_call.1} parent=0 // pred_fallthru
    _
  // Predicated region
  $region22: #{tpu_custom_call.1} parent=0 // pred_check
    _
  $region23: #{tpu_custom_call.1} parent=0 // pred_check_branch
    %24 = sbr.rel (0) target = $region25
  $region24: #{tpu_custom_call.1} parent=0 // pred_region
    _
  $region25: #{tpu_custom_call.1} parent=0 // pred_fallthru
    _
  // Predicated region
  $region26: #{tpu_custom_call.1} parent=0 // pred_check
    _
  $region27: #{tpu_custom_call.1} parent=0 // pred_check_branch
    %26 = sbr.rel (0) target = $region29
  $region28: #{tpu_custom_call.1} parent=0 // pred_region
    _
  $region29: #{tpu_custom_call.1} parent=0 // pred_fallthru
    _
  // Predicated region
  $region30: #{tpu_custom_call.1} parent=0 // pred_check
    _
  $region31: #{tpu_custom_call.1} parent=0 // pred_check_branch
    %28 = sbr.rel (0) target = $region33
  $region32: #{tpu_custom_call.1} parent=0 // pred_region
    _
  $region33: #{tpu_custom_call.1} parent=0 // pred_fallthru
    _
  %v30 = vld [vmem:[%s0] sm:$0xff]
  %v31 = vld [vmem:[%s0 + $0x8] sm:$0xff]
  %v32 = vld [vmem:[%s0 + $0x10] sm:$0xff]
  %v33 = vld [vmem:[%s0 + $0x18] sm:$0xff]
  %v34 = vld [vmem:[%s0 + $0x20] sm:$0xff]
  %v35 = vld [vmem:[%s0 + $0x28] sm:$0xff]
  %v36 = vld [vmem:[%s0 + $0x30] sm:$0xff]
  %v37 = vld [vmem:[%s0 + $0x38] sm:$0xff]
  %v38 = vld [vmem:[%s1] sm:$0xff]
  %v39 = vld [vmem:[%s1 + $0x8] sm:$0xff]
  %v40 = vld [vmem:[%s5] sm:$0x1]
  %v41 = vlaneseq
  %v42 = vshrl.u32 %v41, 7
  %v43 = vsub.s32 0, %v42
  %v44 = vrot.slane %v40, %v43
  %vm45 = vcmask 130048
  %v47 = vsel %vm45, %v30, 0
  %v50 = vsel %vm45, %v31, 0
  %v53 = vsel %vm45, %v32, 0
  %v56 = vsel %vm45, %v33, 0
  %v59 = vsel %vm45, %v34, 0
  %v62 = vsel %vm45, %v35, 0
  %v65 = vsel %vm45, %v36, 0
  %v68 = vsel %vm45, %v37, 0
  %70 = vmatprep.subr.mxu0 0.0
  %71 = vmatpush1.msra.mxu0 0.0
  %72 = vmatprep.subr.mxu0 0.0
  %73 = vmatpush1.msra.mxu0 0.0
  %74 = vmatprep.subr.mxu0 0.0
  %75 = vmatpush1.msra.mxu0 0.0
  %76 = vmatprep.subr.mxu0 0.0
  %77 = vmatpush1.msra.mxu0 0.0
  %78 = vmatprep.subr.mxu0 0.0
  %79 = vmatpush1.msra.mxu0 0.0
  %80 = vmatprep.subr.mxu0 0.0
  %81 = vmatpush1.msra.mxu0 0.0
  %82 = vmatprep.subr.mxu0 0.0
  %83 = vmatpush1.msra.mxu0 0.0
  %84 = vmatprep.subr.mxu0 0.0
  %85 = vmatpush1.msra.mxu0 0.0
  %86 = vmatprep.subr.mxu0 0.0
  %87 = vmatpush1.msra.mxu0 0.0
  %88 = vmatprep.subr.mxu0 0.0
  %89 = vmatpush1.msra.mxu0 0.0
  %90 = vmatprep.subr.mxu0 0.0
  %91 = vmatpush1.msra.mxu0 0.0
  %92 = vmatprep.subr.mxu0 0.0
  %93 = vmatpush1.msra.mxu0 0.0
  %94 = vmatprep.subr.mxu0 0.0
  %95 = vmatpush1.msra.mxu0 0.0
  %96 = vmatprep.subr.mxu0 0.0
  %97 = vmatpush1.msra.mxu0 0.0
  %98 = vmatprep.subr.mxu0 0.0
  %99 = vmatpush1.msra.mxu0 %v39
  %100 = vmatprep.subr.mxu0 0.0
  %101 = vmatpush1.msra.mxu0 %v38
  %102 = vmatprep.subr.mxu0 0.0
  %103 = vmatpush2.msra.mxu0 0.0
  %104 = vmatprep.subr.mxu0 0.0
  %105 = vmatpush2.msra.mxu0 0.0
  %106 = vmatprep.subr.mxu0 0.0
  %107 = vmatpush2.msra.mxu0 0.0
  %108 = vmatprep.subr.mxu0 0.0
  %109 = vmatpush2.msra.mxu0 0.0
  %110 = vmatprep.subr.mxu0 0.0
  %111 = vmatpush2.msra.mxu0 0.0
  %112 = vmatprep.subr.mxu0 0.0
  %113 = vmatpush2.msra.mxu0 0.0
  %114 = vmatprep.subr.mxu0 0.0
  %115 = vmatpush2.msra.mxu0 0.0
  %116 = vmatprep.subr.mxu0 0.0
  %117 = vmatpush2.msra.mxu0 0.0
  %118 = vmatprep.subr.mxu0 0.0
  %119 = vmatpush2.msra.mxu0 0.0
  %120 = vmatprep.subr.mxu0 0.0
  %121 = vmatpush2.msra.mxu0 0.0
  %122 = vmatprep.subr.mxu0 0.0
  %123 = vmatpush2.msra.mxu0 0.0
  %124 = vmatprep.subr.mxu0 0.0
  %125 = vmatpush2.msra.mxu0 0.0
  %126 = vmatprep.subr.mxu0 0.0
  %127 = vmatpush2.msra.mxu0 0.0
  %128 = vmatprep.subr.mxu0 0.0
  %129 = vmatpush2.msra.mxu0 0.0
  %130 = vmatprep.subr.mxu0 0.0
  %131 = vmatpush2.msra.mxu0 0.0
  %132 = vmatprep.subr.mxu0 0.0
  %133 = vmatpush2.msra.mxu0 0.0
  %134 = vmatprep.mubr.f32.mxu0 0.0
  %135 = vmatmul.mubr.f32.gmra.mxu0 %v47
  %v136 = vpop.f32.mrf.mxu0
  %v137 = vadd.f32 %v44, %v136
  %v138 = vpop.f32.mrf.mxu0
  %139 = vmatprep.mubr.f32.mxu0 0.0
  %140 = vmatmul.mubr.f32.gmra.mxu0 %v50
  %v141 = vpop.f32.mrf.mxu0
  %v142 = vadd.f32 %v44, %v141
  %v143 = vpop.f32.mrf.mxu0
  %144 = vmatprep.mubr.f32.mxu0 0.0
  %145 = vmatmul.mubr.f32.gmra.mxu0 %v53
  %v146 = vpop.f32.mrf.mxu0
  %v147 = vadd.f32 %v44, %v146
  %v148 = vpop.f32.mrf.mxu0
  %149 = vmatprep.mubr.f32.mxu0 0.0
  %150 = vmatmul.mubr.f32.gmra.mxu0 %v56
  %v151 = vpop.f32.mrf.mxu0
  %v152 = vadd.f32 %v44, %v151
  %v153 = vpop.f32.mrf.mxu0
  %154 = vmatprep.mubr.f32.mxu0 0.0
  %155 = vmatmul.mubr.f32.gmra.mxu0 %v59
  %v156 = vpop.f32.mrf.mxu0
  %v157 = vadd.f32 %v44, %v156
  %v158 = vpop.f32.mrf.mxu0
  %159 = vmatprep.mubr.f32.mxu0 0.0
  %160 = vmatmul.mubr.f32.gmra.mxu0 %v62
  %v161 = vpop.f32.mrf.mxu0
  %v162 = vadd.f32 %v44, %v161
  %v163 = vpop.f32.mrf.mxu0
  %164 = vmatprep.mubr.f32.mxu0 0.0
  %165 = vmatmul.mubr.f32.gmra.mxu0 %v65
  %v166 = vpop.f32.mrf.mxu0
  %v167 = vadd.f32 %v44, %v166
  %v168 = vpop.f32.mrf.mxu0
  %169 = vmatprep.mubr.f32.mxu0 0.0
  %170 = vmatmul.mubr.f32.gmra.mxu0 %v68
  %v171 = vpop.f32.mrf.mxu0
  %v172 = vadd.f32 %v44, %v171
  %v173 = vpop.f32.mrf.mxu0
  %174 = vdwg.mxu0
  %175 = vst [vmem:[#allocation2] sm:$0xff] %v137
  %176 = vst [vmem:[#allocation2 + $0x8] sm:$0xff] %v142
  %177 = vst [vmem:[#allocation2 + $0x10] sm:$0xff] %v147
  %178 = vst [vmem:[#allocation2 + $0x18] sm:$0xff] %v152
  %179 = vst [vmem:[#allocation2 + $0x20] sm:$0xff] %v157
  %180 = vst [vmem:[#allocation2 + $0x28] sm:$0xff] %v162
  %181 = vst [vmem:[#allocation2 + $0x30] sm:$0xff] %v167
  %182 = vst [vmem:[#allocation2 + $0x38] sm:$0xff] %v172
  %v183 = vld [vmem:[%s2] sm:$0xf]
  %v184 = vld [vmem:[%s2 + $0x4] sm:$0xf]
  %v185 = vld [vmem:[%s2 + $0x8] sm:$0xf]
  %v186 = vld [vmem:[%s2 + $0xc] sm:$0xf]
  %v187 = vld [vmem:[#allocation2] sm:$0xff]
  %v192 = vunpack.c.l.b16 %v183
  %v193 = vunpack.c.l.b16 %v184
  %v194 = vunpack.c.l.b16 %v185
  %v195 = vunpack.c.l.b16 %v186
  %v196 = vpack.c.b16 %v193, %v192
  %v197 = vpack.c.b16 %v195, %v194
  %vm200 = vcmask 261120
  %v202 = vsel %vm200, 0, 0
  %204 = vmatprep.subr.bf16.mxu0 0
  %205 = vmatpush1.bf16.msra.mxu0 0
  %206 = vmatprep.subr.bf16.mxu0 0
  %207 = vmatpush1.bf16.msra.mxu0 0
  %208 = vmatprep.subr.bf16.mxu0 0
  %209 = vmatpush1.bf16.msra.mxu0 0
  %210 = vmatprep.subr.bf16.mxu0 0
  %211 = vmatpush1.bf16.msra.mxu0 0
  %212 = vmatprep.subr.bf16.mxu0 0
  %213 = vmatpush1.bf16.msra.mxu0 0
  %214 = vmatprep.subr.bf16.mxu0 0
  %215 = vmatpush1.bf16.msra.mxu0 0
  %216 = vmatprep.subr.bf16.mxu0 0
  %217 = vmatpush1.bf16.msra.mxu0 %v197
  %218 = vmatprep.subr.bf16.mxu0 0
  %219 = vmatpush1.bf16.msra.mxu0 %v196
  %220 = vmatprep.subr.bf16.mxu0 0
  %221 = vmatpush2.bf16.msra.mxu0 0
  %222 = vmatprep.subr.bf16.mxu0 0
  %223 = vmatpush2.bf16.msra.mxu0 0
  %224 = vmatprep.subr.bf16.mxu0 0
  %225 = vmatpush2.bf16.msra.mxu0 0
  %226 = vmatprep.subr.bf16.mxu0 0
  %227 = vmatpush2.bf16.msra.mxu0 0
  %228 = vmatprep.subr.bf16.mxu0 0
  %229 = vmatpush2.bf16.msra.mxu0 0
  %230 = vmatprep.subr.bf16.mxu0 0
  %231 = vmatpush2.bf16.msra.mxu0 0
  %232 = vmatprep.subr.bf16.mxu0 0
  %233 = vmatpush2.bf16.msra.mxu0 0
  %234 = vmatprep.subr.bf16.mxu0 0
  %235 = vmatpush2.bf16.msra.mxu0 0
  %236 = vmatprep.mubr.bf16.mxu0 0
  %237 = vmatmul.mubr.bf16.gmra.mxu0 %v202
  %v238 = vpop.f32.mrf.mxu0
  %v239 = vadd.f32 0.0, %v238
  %v240 = vpop.f32.mrf.mxu0
  %v241 = vpop.f32.mrf.mxu0
  %v242 = vpop.f32.mrf.mxu0
  %243 = vdwg.mxu0
  %v244 = vadd.f32 %v187, %v239
  %v245 = vxor.u32 %v244, 2147483648
  %v246 = vmul.f32 %v245, 1.442695
  %v247 = vpow.pop %v246
  %v248 = vadd.f32 %v247, 1.0
  %v249 = vrcp.pop %v248
  %v250 = vmul.f32 1.0, %v249
  %v251 = vtanh.pop %v244
  %v252 = vmul.f32 %v250, 0.0
  %254 = vrot.lane.b32.xlu0 %v251, 64
  %v255 = vpop.permute.xlu0 %254
  %v257 = vmul.f32 %v250, %v255
  %259 = vrot.lane.b32.xlu0 %v257, 32
  %v260 = vpop.permute.xlu0 %259
  %v262 = vadd.f32 %v252, %v260
  %v263 = vtanh.pop %v262
  %265 = vrot.lane.b32.xlu0 %v263, 64
  %v266 = vpop.permute.xlu0 %265
  %v268 = vmul.f32 %v250, %v266
  %270 = vrot.lane.b32.xlu0 %v268, 32
  %v271 = vpop.permute.xlu0 %270
  %273 = vst.msk [vmem:[#allocation3] sm:$0xff] %vm200, %v271
  %v274 = vld [vmem:[#allocation2 + $0x8] sm:$0xff]
  %v275 = vpack.c.bf16 %v268, %v268
  %277 = vrot.lane.b32.xlu0 %v275, 32
  %v278 = vpop.permute.xlu0 %277
  %v280 = vsel %vm200, %v278, 0
  %282 = vmatprep.subr.bf16.mxu0 0
  %283 = vmatpush1.bf16.msra.mxu0 0
  %284 = vmatprep.subr.bf16.mxu0 0
  %285 = vmatpush1.bf16.msra.mxu0 0
  %286 = vmatprep.subr.bf16.mxu0 0
  %287 = vmatpush1.bf16.msra.mxu0 0
  %288 = vmatprep.subr.bf16.mxu0 0
  %289 = vmatpush1.bf16.msra.mxu0 0
  %290 = vmatprep.subr.bf16.mxu0 0
  %291 = vmatpush1.bf16.msra.mxu0 0
  %292 = vmatprep.subr.bf16.mxu0 0
  %293 = vmatpush1.bf16.msra.mxu0 0
  %294 = vmatprep.subr.bf16.mxu0 0
  %295 = vmatpush1.bf16.msra.mxu0 %v197
  %296 = vmatprep.subr.bf16.mxu0 0
  %297 = vmatpush1.bf16.msra.mxu0 %v196
  %298 = vmatprep.subr.bf16.mxu0 0
  %299 = vmatpush2.bf16.msra.mxu0 0
  %300 = vmatprep.subr.bf16.mxu0 0
  %301 = vmatpush2.bf16.msra.mxu0 0
  %302 = vmatprep.subr.bf16.mxu0 0
  %303 = vmatpush2.bf16.msra.mxu0 0
  %304 = vmatprep.subr.bf16.mxu0 0
  %305 = vmatpush2.bf16.msra.mxu0 0
  %306 = vmatprep.subr.bf16.mxu0 0
  %307 = vmatpush2.bf16.msra.mxu0 0
  %308 = vmatprep.subr.bf16.mxu0 0
  %309 = vmatpush2.bf16.msra.mxu0 0
  %310 = vmatprep.subr.bf16.mxu0 0
  %311 = vmatpush2.bf16.msra.mxu0 0
  %312 = vmatprep.subr.bf16.mxu0 0
  %313 = vmatpush2.bf16.msra.mxu0 0
  %314 = vmatprep.mubr.bf16.mxu0 0
  %315 = vmatmul.mubr.bf16.gmra.mxu0 %v280
  %v316 = vpop.f32.mrf.mxu0
  %v317 = vadd.f32 0.0, %v316
  %v318 = vpop.f32.mrf.mxu0
  %v319 = vpop.f32.mrf.mxu0
  %v320 = vpop.f32.mrf.mxu0
  %321 = vdwg.mxu0
  %v322 = vadd.f32 %v274, %v317
  %v323 = vxor.u32 %v322, 2147483648
  %v324 = vmul.f32 %v323, 1.442695
  %v325 = vpow.pop %v324
  %v326 = vadd.f32 %v325, 1.0
  %v327 = vrcp.pop %v326
  %v328 = vmul.f32 1.0, %v327
  %v329 = vtanh.pop %v322
  %v330 = vmul.f32 %v328, %v262
  %332 = vrot.lane.b32.xlu0 %v329, 64
  %v333 = vpop.permute.xlu0 %332
  %v335 = vmul.f32 %v328, %v333
  %337 = vrot.lane.b32.xlu0 %v335, 32
  %v338 = vpop.permute.xlu0 %337
  %v340 = vadd.f32 %v330, %v338
  %v341 = vtanh.pop %v340
  %343 = vrot.lane.b32.xlu0 %v341, 64
  %v344 = vpop.permute.xlu0 %343
  %v346 = vmul.f32 %v328, %v344
  %348 = vrot.lane.b32.xlu0 %v346, 32
  %v349 = vpop.permute.xlu0 %348
  %351 = vst.msk [vmem:[#allocation3 + $0x8] sm:$0xff] %vm200, %v349
  %v352 = vld [vmem:[#allocation2 + $0x10] sm:$0xff]
  %v353 = vpack.c.bf16 %v346, %v346
  %355 = vrot.lane.b32.xlu0 %v353, 32
  %v356 = vpop.permute.xlu0 %355
  %v358 = vsel %vm200, %v356, 0
  %360 = vmatprep.subr.bf16.mxu0 0
  %361 = vmatpush1.bf16.msra.mxu0 0
  %362 = vmatprep.subr.bf16.mxu0 0
  %363 = vmatpush1.bf16.msra.mxu0 0
  %364 = vmatprep.subr.bf16.mxu0 0
  %365 = vmatpush1.bf16.msra.mxu0 0
  %366 = vmatprep.subr.bf16.mxu0 0
  %367 = vmatpush1.bf16.msra.mxu0 0
  %368 = vmatprep.subr.bf16.mxu0 0
  %369 = vmatpush1.bf16.msra.mxu0 0
  %370 = vmatprep.subr.bf16.mxu0 0
  %371 = vmatpush1.bf16.msra.mxu0 0
  %372 = vmatprep.subr.bf16.mxu0 0
  %373 = vmatpush1.bf16.msra.mxu0 %v197
  %374 = vmatprep.subr.bf16.mxu0 0
  %375 = vmatpush1.bf16.msra.mxu0 %v196
  %376 = vmatprep.subr.bf16.mxu0 0
  %377 = vmatpush2.bf16.msra.mxu0 0
  %378 = vmatprep.subr.bf16.mxu0 0
  %379 = vmatpush2.bf16.msra.mxu0 0
  %380 = vmatprep.subr.bf16.mxu0 0
  %381 = vmatpush2.bf16.msra.mxu0 0
  %382 = vmatprep.subr.bf16.mxu0 0
  %383 = vmatpush2.bf16.msra.mxu0 0
  %384 = vmatprep.subr.bf16.mxu0 0
  %385 = vmatpush2.bf16.msra.mxu0 0
  %386 = vmatprep.subr.bf16.mxu0 0
  %387 = vmatpush2.bf16.msra.mxu0 0
  %388 = vmatprep.subr.bf16.mxu0 0
  %389 = vmatpush2.bf16.msra.mxu0 0
  %390 = vmatprep.subr.bf16.mxu0 0
  %391 = vmatpush2.bf16.msra.mxu0 0
  %392 = vmatprep.mubr.bf16.mxu0 0
  %393 = vmatmul.mubr.bf16.gmra.mxu0 %v358
  %v394 = vpop.f32.mrf.mxu0
  %v395 = vadd.f32 0.0, %v394
  %v396 = vpop.f32.mrf.mxu0
  %v397 = vpop.f32.mrf.mxu0
  %v398 = vpop.f32.mrf.mxu0
  %399 = vdwg.mxu0
  %v400 = vadd.f32 %v352, %v395
  %v401 = vxor.u32 %v400, 2147483648
  %v402 = vmul.f32 %v401, 1.442695
  %v403 = vpow.pop %v402
  %v404 = vadd.f32 %v403, 1.0
  %v405 = vrcp.pop %v404
  %v406 = vmul.f32 1.0, %v405
  %v407 = vtanh.pop %v400
  %v408 = vmul.f32 %v406, %v340
  %410 = vrot.lane.b32.xlu0 %v407, 64
  %v411 = vpop.permute.xlu0 %410
  %v413 = vmul.f32 %v406, %v411
  %415 = vrot.lane.b32.xlu0 %v413, 32
  %v416 = vpop.permute.xlu0 %415
  %v418 = vadd.f32 %v408, %v416
  %v419 = vtanh.pop %v418
  %421 = vrot.lane.b32.xlu0 %v419, 64
  %v422 = vpop.permute.xlu0 %421
  %v424 = vmul.f32 %v406, %v422
  %426 = vrot.lane.b32.xlu0 %v424, 32
  %v427 = vpop.permute.xlu0 %426
  %429 = vst.msk [vmem:[#allocation3 + $0x10] sm:$0xff] %vm200, %v427
  %v430 = vld [vmem:[#allocation2 + $0x18] sm:$0xff]
  %v431 = vpack.c.bf16 %v424, %v424
  %433 = vrot.lane.b32.xlu0 %v431, 32
  %v434 = vpop.permute.xlu0 %433
  %v436 = vsel %vm200, %v434, 0
  %438 = vmatprep.subr.bf16.mxu0 0
  %439 = vmatpush1.bf16.msra.mxu0 0
  %440 = vmatprep.subr.bf16.mxu0 0
  %441 = vmatpush1.bf16.msra.mxu0 0
  %442 = vmatprep.subr.bf16.mxu0 0
  %443 = vmatpush1.bf16.msra.mxu0 0
  %444 = vmatprep.subr.bf16.mxu0 0
  %445 = vmatpush1.bf16.msra.mxu0 0
  %446 = vmatprep.subr.bf16.mxu0 0
  %447 = vmatpush1.bf16.msra.mxu0 0
  %448 = vmatprep.subr.bf16.mxu0 0
  %449 = vmatpush1.bf16.msra.mxu0 0
  %450 = vmatprep.subr.bf16.mxu0 0
  %451 = vmatpush1.bf16.msra.mxu0 %v197
  %452 = vmatprep.subr.bf16.mxu0 0
  %453 = vmatpush1.bf16.msra.mxu0 %v196
  %454 = vmatprep.subr.bf16.mxu0 0
  %455 = vmatpush2.bf16.msra.mxu0 0
  %456 = vmatprep.subr.bf16.mxu0 0
  %457 = vmatpush2.bf16.msra.mxu0 0
  %458 = vmatprep.subr.bf16.mxu0 0
  %459 = vmatpush2.bf16.msra.mxu0 0
  %460 = vmatprep.subr.bf16.mxu0 0
  %461 = vmatpush2.bf16.msra.mxu0 0
  %462 = vmatprep.subr.bf16.mxu0 0
  %463 = vmatpush2.bf16.msra.mxu0 0
  %464 = vmatprep.subr.bf16.mxu0 0
  %465 = vmatpush2.bf16.msra.mxu0 0
  %466 = vmatprep.subr.bf16.mxu0 0
  %467 = vmatpush2.bf16.msra.mxu0 0
  %468 = vmatprep.subr.bf16.mxu0 0
  %469 = vmatpush2.bf16.msra.mxu0 0
  %470 = vmatprep.mubr.bf16.mxu0 0
  %471 = vmatmul.mubr.bf16.gmra.mxu0 %v436
  %v472 = vpop.f32.mrf.mxu0
  %v473 = vadd.f32 0.0, %v472
  %v474 = vpop.f32.mrf.mxu0
  %v475 = vpop.f32.mrf.mxu0
  %v476 = vpop.f32.mrf.mxu0
  %477 = vdwg.mxu0
  %v478 = vadd.f32 %v430, %v473
  %v479 = vxor.u32 %v478, 2147483648
  %v480 = vmul.f32 %v479, 1.442695
  %v481 = vpow.pop %v480
  %v482 = vadd.f32 %v481, 1.0
  %v483 = vrcp.pop %v482
  %v484 = vmul.f32 1.0, %v483
  %v485 = vtanh.pop %v478
  %v486 = vmul.f32 %v484, %v418
  %488 = vrot.lane.b32.xlu0 %v485, 64
  %v489 = vpop.permute.xlu0 %488
  %v491 = vmul.f32 %v484, %v489
  %493 = vrot.lane.b32.xlu0 %v491, 32
  %v494 = vpop.permute.xlu0 %493
  %v496 = vadd.f32 %v486, %v494
  %v497 = vtanh.pop %v496
  %499 = vrot.lane.b32.xlu0 %v497, 64
  %v500 = vpop.permute.xlu0 %499
  %v502 = vmul.f32 %v484, %v500
  %504 = vrot.lane.b32.xlu0 %v502, 32
  %v505 = vpop.permute.xlu0 %504
  %507 = vst.msk [vmem:[#allocation3 + $0x18] sm:$0xff] %vm200, %v505
  %v508 = vld [vmem:[#allocation2 + $0x20] sm:$0xff]
  %v509 = vpack.c.bf16 %v502, %v502
  %511 = vrot.lane.b32.xlu0 %v509, 32
  %v512 = vpop.permute.xlu0 %511
  %v514 = vsel %vm200, %v512, 0
  %516 = vmatprep.subr.bf16.mxu0 0
  %517 = vmatpush1.bf16.msra.mxu0 0
  %518 = vmatprep.subr.bf16.mxu0 0
  %519 = vmatpush1.bf16.msra.mxu0 0
  %520 = vmatprep.subr.bf16.mxu0 0
  %521 = vmatpush1.bf16.msra.mxu0 0
  %522 = vmatprep.subr.bf16.mxu0 0
  %523 = vmatpush1.bf16.msra.mxu0 0
  %524 = vmatprep.subr.bf16.mxu0 0
  %525 = vmatpush1.bf16.msra.mxu0 0
  %526 = vmatprep.subr.bf16.mxu0 0
  %527 = vmatpush1.bf16.msra.mxu0 0
  %528 = vmatprep.subr.bf16.mxu0 0
  %529 = vmatpush1.bf16.msra.mxu0 %v197
  %530 = vmatprep.subr.bf16.mxu0 0
  %531 = vmatpush1.bf16.msra.mxu0 %v196
  %532 = vmatprep.subr.bf16.mxu0 0
  %533 = vmatpush2.bf16.msra.mxu0 0
  %534 = vmatprep.subr.bf16.mxu0 0
  %535 = vmatpush2.bf16.msra.mxu0 0
  %536 = vmatprep.subr.bf16.mxu0 0
  %537 = vmatpush2.bf16.msra.mxu0 0
  %538 = vmatprep.subr.bf16.mxu0 0
  %539 = vmatpush2.bf16.msra.mxu0 0
  %540 = vmatprep.subr.bf16.mxu0 0
  %541 = vmatpush2.bf16.msra.mxu0 0
  %542 = vmatprep.subr.bf16.mxu0 0
  %543 = vmatpush2.bf16.msra.mxu0 0
  %544 = vmatprep.subr.bf16.mxu0 0
  %545 = vmatpush2.bf16.msra.mxu0 0
  %546 = vmatprep.subr.bf16.mxu0 0
  %547 = vmatpush2.bf16.msra.mxu0 0
  %548 = vmatprep.mubr.bf16.mxu0 0
  %549 = vmatmul.mubr.bf16.gmra.mxu0 %v514
  %v550 = vpop.f32.mrf.mxu0
  %v551 = vadd.f32 0.0, %v550
  %v552 = vpop.f32.mrf.mxu0
  %v553 = vpop.f32.mrf.mxu0
  %v554 = vpop.f32.mrf.mxu0
  %555 = vdwg.mxu0
  %v556 = vadd.f32 %v508, %v551
  %v557 = vxor.u32 %v556, 2147483648
  %v558 = vmul.f32 %v557, 1.442695
  %v559 = vpow.pop %v558
  %v560 = vadd.f32 %v559, 1.0
  %v561 = vrcp.pop %v560
  %v562 = vmul.f32 1.0, %v561
  %v563 = vtanh.pop %v556
  %v564 = vmul.f32 %v562, %v496
  %566 = vrot.lane.b32.xlu0 %v563, 64
  %v567 = vpop.permute.xlu0 %566
  %v569 = vmul.f32 %v562, %v567
  %571 = vrot.lane.b32.xlu0 %v569, 32
  %v572 = vpop.permute.xlu0 %571
  %v574 = vadd.f32 %v564, %v572
  %v575 = vtanh.pop %v574
  %577 = vrot.lane.b32.xlu0 %v575, 64
  %v578 = vpop.permute.xlu0 %577
  %v580 = vmul.f32 %v562, %v578
  %582 = vrot.lane.b32.xlu0 %v580, 32
  %v583 = vpop.permute.xlu0 %582
  %585 = vst.msk [vmem:[#allocation3 + $0x20] sm:$0xff] %vm200, %v583
  %v586 = vld [vmem:[#allocation2 + $0x28] sm:$0xff]
  %v587 = vpack.c.bf16 %v580, %v580
  %589 = vrot.lane.b32.xlu0 %v587, 32
  %v590 = vpop.permute.xlu0 %589
  %v592 = vsel %vm200, %v590, 0
  %594 = vmatprep.subr.bf16.mxu0 0
  %595 = vmatpush1.bf16.msra.mxu0 0
  %596 = vmatprep.subr.bf16.mxu0 0
  %597 = vmatpush1.bf16.msra.mxu0 0
  %598 = vmatprep.subr.bf16.mxu0 0
  %599 = vmatpush1.bf16.msra.mxu0 0
  %600 = vmatprep.subr.bf16.mxu0 0
  %601 = vmatpush1.bf16.msra.mxu0 0
  %602 = vmatprep.subr.bf16.mxu0 0
  %603 = vmatpush1.bf16.msra.mxu0 0
  %604 = vmatprep.subr.bf16.mxu0 0
  %605 = vmatpush1.bf16.msra.mxu0 0
  %606 = vmatprep.subr.bf16.mxu0 0
  %607 = vmatpush1.bf16.msra.mxu0 %v197
  %608 = vmatprep.subr.bf16.mxu0 0
  %609 = vmatpush1.bf16.msra.mxu0 %v196
  %610 = vmatprep.subr.bf16.mxu0 0
  %611 = vmatpush2.bf16.msra.mxu0 0
  %612 = vmatprep.subr.bf16.mxu0 0
  %613 = vmatpush2.bf16.msra.mxu0 0
  %614 = vmatprep.subr.bf16.mxu0 0
  %615 = vmatpush2.bf16.msra.mxu0 0
  %616 = vmatprep.subr.bf16.mxu0 0
  %617 = vmatpush2.bf16.msra.mxu0 0
  %618 = vmatprep.subr.bf16.mxu0 0
  %619 = vmatpush2.bf16.msra.mxu0 0
  %620 = vmatprep.subr.bf16.mxu0 0
  %621 = vmatpush2.bf16.msra.mxu0 0
  %622 = vmatprep.subr.bf16.mxu0 0
  %623 = vmatpush2.bf16.msra.mxu0 0
  %624 = vmatprep.subr.bf16.mxu0 0
  %625 = vmatpush2.bf16.msra.mxu0 0
  %626 = vmatprep.mubr.bf16.mxu0 0
  %627 = vmatmul.mubr.bf16.gmra.mxu0 %v592
  %v628 = vpop.f32.mrf.mxu0
  %v629 = vadd.f32 0.0, %v628
  %v630 = vpop.f32.mrf.mxu0
  %v631 = vpop.f32.mrf.mxu0
  %v632 = vpop.f32.mrf.mxu0
  %633 = vdwg.mxu0
  %v634 = vadd.f32 %v586, %v629
  %v635 = vxor.u32 %v634, 2147483648
  %v636 = vmul.f32 %v635, 1.442695
  %v637 = vpow.pop %v636
  %v638 = vadd.f32 %v637, 1.0
  %v639 = vrcp.pop %v638
  %v640 = vmul.f32 1.0, %v639
  %v641 = vtanh.pop %v634
  %v642 = vmul.f32 %v640, %v574
  %644 = vrot.lane.b32.xlu0 %v641, 64
  %v645 = vpop.permute.xlu0 %644
  %v647 = vmul.f32 %v640, %v645
  %649 = vrot.lane.b32.xlu0 %v647, 32
  %v650 = vpop.permute.xlu0 %649
  %v652 = vadd.f32 %v642, %v650
  %v653 = vtanh.pop %v652
  %655 = vrot.lane.b32.xlu0 %v653, 64
  %v656 = vpop.permute.xlu0 %655
  %v658 = vmul.f32 %v640, %v656
  %660 = vrot.lane.b32.xlu0 %v658, 32
  %v661 = vpop.permute.xlu0 %660
  %663 = vst.msk [vmem:[#allocation3 + $0x28] sm:$0xff] %vm200, %v661
  %v664 = vld [vmem:[#allocation2 + $0x30] sm:$0xff]
  %v665 = vpack.c.bf16 %v658, %v658
  %667 = vrot.lane.b32.xlu0 %v665, 32
  %v668 = vpop.permute.xlu0 %667
  %v670 = vsel %vm200, %v668, 0
  %672 = vmatprep.subr.bf16.mxu0 0
  %673 = vmatpush1.bf16.msra.mxu0 0
  %674 = vmatprep.subr.bf16.mxu0 0
  %675 = vmatpush1.bf16.msra.mxu0 0
  %676 = vmatprep.subr.bf16.mxu0 0
  %677 = vmatpush1.bf16.msra.mxu0 0
  %678 = vmatprep.subr.bf16.mxu0 0
  %679 = vmatpush1.bf16.msra.mxu0 0
  %680 = vmatprep.subr.bf16.mxu0 0
  %681 = vmatpush1.bf16.msra.mxu0 0
  %682 = vmatprep.subr.bf16.mxu0 0
  %683 = vmatpush1.bf16.msra.mxu0 0
  %684 = vmatprep.subr.bf16.mxu0 0
  %685 = vmatpush1.bf16.msra.mxu0 %v197
  %686 = vmatprep.subr.bf16.mxu0 0
  %687 = vmatpush1.bf16.msra.mxu0 %v196
  %688 = vmatprep.subr.bf16.mxu0 0
  %689 = vmatpush2.bf16.msra.mxu0 0
  %690 = vmatprep.subr.bf16.mxu0 0
  %691 = vmatpush2.bf16.msra.mxu0 0
  %692 = vmatprep.subr.bf16.mxu0 0
  %693 = vmatpush2.bf16.msra.mxu0 0
  %694 = vmatprep.subr.bf16.mxu0 0
  %695 = vmatpush2.bf16.msra.mxu0 0
  %696 = vmatprep.subr.bf16.mxu0 0
  %697 = vmatpush2.bf16.msra.mxu0 0
  %698 = vmatprep.subr.bf16.mxu0 0
  %699 = vmatpush2.bf16.msra.mxu0 0
  %700 = vmatprep.subr.bf16.mxu0 0
  %701 = vmatpush2.bf16.msra.mxu0 0
  %702 = vmatprep.subr.bf16.mxu0 0
  %703 = vmatpush2.bf16.msra.mxu0 0
  %704 = vmatprep.mubr.bf16.mxu0 0
  %705 = vmatmul.mubr.bf16.gmra.mxu0 %v670
  %v706 = vpop.f32.mrf.mxu0
  %v707 = vadd.f32 0.0, %v706
  %v708 = vpop.f32.mrf.mxu0
  %v709 = vpop.f32.mrf.mxu0
  %v710 = vpop.f32.mrf.mxu0
  %711 = vdwg.mxu0
  %v712 = vadd.f32 %v664, %v707
  %v713 = vxor.u32 %v712, 2147483648
  %v714 = vmul.f32 %v713, 1.442695
  %v715 = vpow.pop %v714
  %v716 = vadd.f32 %v715, 1.0
  %v717 = vrcp.pop %v716
  %v718 = vmul.f32 1.0, %v717
  %v719 = vtanh.pop %v712
  %v720 = vmul.f32 %v718, %v652
  %722 = vrot.lane.b32.xlu0 %v719, 64
  %v723 = vpop.permute.xlu0 %722
  %v725 = vmul.f32 %v718, %v723
  %727 = vrot.lane.b32.xlu0 %v725, 32
  %v728 = vpop.permute.xlu0 %727
  %v730 = vadd.f32 %v720, %v728
  %v731 = vtanh.pop %v730
  %733 = vrot.lane.b32.xlu0 %v731, 64
  %v734 = vpop.permute.xlu0 %733
  %v736 = vmul.f32 %v718, %v734
  %738 = vrot.lane.b32.xlu0 %v736, 32
  %v739 = vpop.permute.xlu0 %738
  %741 = vst.msk [vmem:[#allocation3 + $0x30] sm:$0xff] %vm200, %v739
  %v742 = vld [vmem:[#allocation2 + $0x38] sm:$0xff]
  %v743 = vpack.c.bf16 %v736, %v736
  %745 = vrot.lane.b32.xlu0 %v743, 32
  %v746 = vpop.permute.xlu0 %745
  %v748 = vsel %vm200, %v746, 0
  %750 = vmatprep.subr.bf16.mxu0 0
  %751 = vmatpush1.bf16.msra.mxu0 0
  %752 = vmatprep.subr.bf16.mxu0 0
  %753 = vmatpush1.bf16.msra.mxu0 0
  %754 = vmatprep.subr.bf16.mxu0 0
  %755 = vmatpush1.bf16.msra.mxu0 0
  %756 = vmatprep.subr.bf16.mxu0 0
  %757 = vmatpush1.bf16.msra.mxu0 0
  %758 = vmatprep.subr.bf16.mxu0 0
  %759 = vmatpush1.bf16.msra.mxu0 0
  %760 = vmatprep.subr.bf16.mxu0 0
  %761 = vmatpush1.bf16.msra.mxu0 0
  %762 = vmatprep.subr.bf16.mxu0 0
  %763 = vmatpush1.bf16.msra.mxu0 %v197
  %764 = vmatprep.subr.bf16.mxu0 0
  %765 = vmatpush1.bf16.msra.mxu0 %v196
  %766 = vmatprep.subr.bf16.mxu0 0
  %767 = vmatpush2.bf16.msra.mxu0 0
  %768 = vmatprep.subr.bf16.mxu0 0
  %769 = vmatpush2.bf16.msra.mxu0 0
  %770 = vmatprep.subr.bf16.mxu0 0
  %771 = vmatpush2.bf16.msra.mxu0 0
  %772 = vmatprep.subr.bf16.mxu0 0
  %773 = vmatpush2.bf16.msra.mxu0 0
  %774 = vmatprep.subr.bf16.mxu0 0
  %775 = vmatpush2.bf16.msra.mxu0 0
  %776 = vmatprep.subr.bf16.mxu0 0
  %777 = vmatpush2.bf16.msra.mxu0 0
  %778 = vmatprep.subr.bf16.mxu0 0
  %779 = vmatpush2.bf16.msra.mxu0 0
  %780 = vmatprep.subr.bf16.mxu0 0
  %781 = vmatpush2.bf16.msra.mxu0 0
  %782 = vmatprep.mubr.bf16.mxu0 0
  %783 = vmatmul.mubr.bf16.gmra.mxu0 %v748
  %v784 = vpop.f32.mrf.mxu0
  %v785 = vadd.f32 0.0, %v784
  %v786 = vpop.f32.mrf.mxu0
  %v787 = vpop.f32.mrf.mxu0
  %v788 = vpop.f32.mrf.mxu0
  %789 = vdwg.mxu0
  %v790 = vadd.f32 %v742, %v785
  %v791 = vxor.u32 %v790, 2147483648
  %v792 = vmul.f32 %v791, 1.442695
  %v793 = vpow.pop %v792
  %v794 = vadd.f32 %v793, 1.0
  %v795 = vrcp.pop %v794
  %v796 = vmul.f32 1.0, %v795
  %v797 = vtanh.pop %v790
  %v798 = vmul.f32 %v796, %v730
  %800 = vrot.lane.b32.xlu0 %v797, 64
  %v801 = vpop.permute.xlu0 %800
  %v803 = vmul.f32 %v796, %v801
  %805 = vrot.lane.b32.xlu0 %v803, 32
  %v806 = vpop.permute.xlu0 %805
  %v808 = vadd.f32 %v798, %v806
  %v809 = vtanh.pop %v808
  %811 = vrot.lane.b32.xlu0 %v809, 64
  %v812 = vpop.permute.xlu0 %811
  %v814 = vmul.f32 %v796, %v812
  %816 = vrot.lane.b32.xlu0 %v814, 32
  %v817 = vpop.permute.xlu0 %816
  %819 = vst.msk [vmem:[#allocation3 + $0x38] sm:$0xff] %vm200, %v817
  %v820 = vld [vmem:[#allocation3] sm:$0xff]
  %v821 = vld [vmem:[#allocation3 + $0x8] sm:$0xff]
  %v822 = vld [vmem:[#allocation3 + $0x10] sm:$0xff]
  %v823 = vld [vmem:[#allocation3 + $0x18] sm:$0xff]
  %v824 = vld [vmem:[#allocation3 + $0x20] sm:$0xff]
  %v825 = vld [vmem:[#allocation3 + $0x28] sm:$0xff]
  %v826 = vld [vmem:[#allocation3 + $0x30] sm:$0xff]
  %v827 = vld [vmem:[#allocation3 + $0x38] sm:$0xff]
  %v828 = vld [vmem:[%s3] sm:$0xff]
  %v829 = vld [vmem:[%s3 + $0x8] sm:$0xff]
  %v830 = vld [vmem:[%s3 + $0x10] sm:$0xff]
  %v831 = vld [vmem:[%s3 + $0x18] sm:$0xff]
  %v832 = vld [vmem:[%s5 + $0x1] sm:$0x1]
  %v833 = vlaneseq
  %v834 = vshrl.u32 %v833, 7
  %v835 = vsub.s32 0, %v834
  %v836 = vrot.slane %v832, %v835
  %v838 = vsel %vm200, %v820, 0
  %v841 = vsel %vm200, %v821, 0
  %v844 = vsel %vm200, %v822, 0
  %v847 = vsel %vm200, %v823, 0
  %v850 = vsel %vm200, %v824, 0
  %v853 = vsel %vm200, %v825, 0
  %v856 = vsel %vm200, %v826, 0
  %v859 = vsel %vm200, %v827, 0
  %861 = vmatprep.subr.mxu0 0.0
  %862 = vmatpush1.msra.mxu0 0.0
  %863 = vmatprep.subr.mxu0 0.0
  %864 = vmatpush1.msra.mxu0 0.0
  %865 = vmatprep.subr.mxu0 0.0
  %866 = vmatpush1.msra.mxu0 0.0
  %867 = vmatprep.subr.mxu0 0.0
  %868 = vmatpush1.msra.mxu0 0.0
  %869 = vmatprep.subr.mxu0 0.0
  %870 = vmatpush1.msra.mxu0 0.0
  %871 = vmatprep.subr.mxu0 0.0
  %872 = vmatpush1.msra.mxu0 0.0
  %873 = vmatprep.subr.mxu0 0.0
  %874 = vmatpush1.msra.mxu0 0.0
  %875 = vmatprep.subr.mxu0 0.0
  %876 = vmatpush1.msra.mxu0 0.0
  %877 = vmatprep.subr.mxu0 0.0
  %878 = vmatpush1.msra.mxu0 0.0
  %879 = vmatprep.subr.mxu0 0.0
  %880 = vmatpush1.msra.mxu0 0.0
  %881 = vmatprep.subr.mxu0 0.0
  %882 = vmatpush1.msra.mxu0 0.0
  %883 = vmatprep.subr.mxu0 0.0
  %884 = vmatpush1.msra.mxu0 0.0
  %885 = vmatprep.subr.mxu0 0.0
  %886 = vmatpush1.msra.mxu0 %v831
  %887 = vmatprep.subr.mxu0 0.0
  %888 = vmatpush1.msra.mxu0 %v830
  %889 = vmatprep.subr.mxu0 0.0
  %890 = vmatpush1.msra.mxu0 %v829
  %891 = vmatprep.subr.mxu0 0.0
  %892 = vmatpush1.msra.mxu0 %v828
  %893 = vmatprep.subr.mxu0 0.0
  %894 = vmatpush2.msra.mxu0 0.0
  %895 = vmatprep.subr.mxu0 0.0
  %896 = vmatpush2.msra.mxu0 0.0
  %897 = vmatprep.subr.mxu0 0.0
  %898 = vmatpush2.msra.mxu0 0.0
  %899 = vmatprep.subr.mxu0 0.0
  %900 = vmatpush2.msra.mxu0 0.0
  %901 = vmatprep.subr.mxu0 0.0
  %902 = vmatpush2.msra.mxu0 0.0
  %903 = vmatprep.subr.mxu0 0.0
  %904 = vmatpush2.msra.mxu0 0.0
  %905 = vmatprep.subr.mxu0 0.0
  %906 = vmatpush2.msra.mxu0 0.0
  %907 = vmatprep.subr.mxu0 0.0
  %908 = vmatpush2.msra.mxu0 0.0
  %909 = vmatprep.subr.mxu0 0.0
  %910 = vmatpush2.msra.mxu0 0.0
  %911 = vmatprep.subr.mxu0 0.0
  %912 = vmatpush2.msra.mxu0 0.0
  %913 = vmatprep.subr.mxu0 0.0
  %914 = vmatpush2.msra.mxu0 0.0
  %915 = vmatprep.subr.mxu0 0.0
  %916 = vmatpush2.msra.mxu0 0.0
  %917 = vmatprep.subr.mxu0 0.0
  %918 = vmatpush2.msra.mxu0 0.0
  %919 = vmatprep.subr.mxu0 0.0
  %920 = vmatpush2.msra.mxu0 0.0
  %921 = vmatprep.subr.mxu0 0.0
  %922 = vmatpush2.msra.mxu0 0.0
  %923 = vmatprep.subr.mxu0 0.0
  %924 = vmatpush2.msra.mxu0 0.0
  %925 = vmatprep.mubr.f32.mxu0 0.0
  %926 = vmatmul.mubr.f32.gmra.mxu0 %v838
  %v927 = vpop.f32.mrf.mxu0
  %v928 = vadd.f32 %v836, %v927
  %v929 = vpop.f32.mrf.mxu0
  %930 = vmatprep.mubr.f32.mxu0 0.0
  %931 = vmatmul.mubr.f32.gmra.mxu0 %v841
  %v932 = vpop.f32.mrf.mxu0
  %v933 = vadd.f32 %v836, %v932
  %v934 = vpop.f32.mrf.mxu0
  %935 = vmatprep.mubr.f32.mxu0 0.0
  %936 = vmatmul.mubr.f32.gmra.mxu0 %v844
  %v937 = vpop.f32.mrf.mxu0
  %v938 = vadd.f32 %v836, %v937
  %v939 = vpop.f32.mrf.mxu0
  %940 = vmatprep.mubr.f32.mxu0 0.0
  %941 = vmatmul.mubr.f32.gmra.mxu0 %v847
  %v942 = vpop.f32.mrf.mxu0
  %v943 = vadd.f32 %v836, %v942
  %v944 = vpop.f32.mrf.mxu0
  %945 = vmatprep.mubr.f32.mxu0 0.0
  %946 = vmatmul.mubr.f32.gmra.mxu0 %v850
  %v947 = vpop.f32.mrf.mxu0
  %v948 = vadd.f32 %v836, %v947
  %v949 = vpop.f32.mrf.mxu0
  %950 = vmatprep.mubr.f32.mxu0 0.0
  %951 = vmatmul.mubr.f32.gmra.mxu0 %v853
  %v952 = vpop.f32.mrf.mxu0
  %v953 = vadd.f32 %v836, %v952
  %v954 = vpop.f32.mrf.mxu0
  %955 = vmatprep.mubr.f32.mxu0 0.0
  %956 = vmatmul.mubr.f32.gmra.mxu0 %v856
  %v957 = vpop.f32.mrf.mxu0
  %v958 = vadd.f32 %v836, %v957
  %v959 = vpop.f32.mrf.mxu0
  %960 = vmatprep.mubr.f32.mxu0 0.0
  %961 = vmatmul.mubr.f32.gmra.mxu0 %v859
  %v962 = vpop.f32.mrf.mxu0
  %v963 = vadd.f32 %v836, %v962
  %v964 = vpop.f32.mrf.mxu0
  %965 = vdwg.mxu0
  %966 = vst [vmem:[#allocation2] sm:$0xff] %v928
  %967 = vst [vmem:[#allocation2 + $0x8] sm:$0xff] %v933
  %968 = vst [vmem:[#allocation2 + $0x10] sm:$0xff] %v938
  %969 = vst [vmem:[#allocation2 + $0x18] sm:$0xff] %v943
  %970 = vst [vmem:[#allocation2 + $0x20] sm:$0xff] %v948
  %971 = vst [vmem:[#allocation2 + $0x28] sm:$0xff] %v953
  %972 = vst [vmem:[#allocation2 + $0x30] sm:$0xff] %v958
  %973 = vst [vmem:[#allocation2 + $0x38] sm:$0xff] %v963
  %v974 = vld [vmem:[%s4] sm:$0xf]
  %v975 = vld [vmem:[%s4 + $0x4] sm:$0xf]
  %v976 = vld [vmem:[%s4 + $0x8] sm:$0xf]
  %v977 = vld [vmem:[%s4 + $0xc] sm:$0xf]
  %v978 = vld [vmem:[#allocation2] sm:$0xff]
  %v983 = vunpack.c.l.b16 %v974
  %v984 = vunpack.c.l.b16 %v975
  %v985 = vunpack.c.l.b16 %v976
  %v986 = vunpack.c.l.b16 %v977
  %v987 = vpack.c.b16 %v984, %v983
  %v988 = vpack.c.b16 %v986, %v985
  %991 = vmatprep.subr.bf16.mxu0 0
  %992 = vmatpush1.bf16.msra.mxu0 0
  %993 = vmatprep.subr.bf16.mxu0 0
  %994 = vmatpush1.bf16.msra.mxu0 0
  %995 = vmatprep.subr.bf16.mxu0 0
  %996 = vmatpush1.bf16.msra.mxu0 0
  %997 = vmatprep.subr.bf16.mxu0 0
  %998 = vmatpush1.bf16.msra.mxu0 0
  %999 = vmatprep.subr.bf16.mxu0 0
  %1000 = vmatpush1.bf16.msra.mxu0 0
  %1001 = vmatprep.subr.bf16.mxu0 0
  %1002 = vmatpush1.bf16.msra.mxu0 0
  %1003 = vmatprep.subr.bf16.mxu0 0
  %1004 = vmatpush1.bf16.msra.mxu0 %v988
  %1005 = vmatprep.subr.bf16.mxu0 0
  %1006 = vmatpush1.bf16.msra.mxu0 %v987
  %1007 = vmatprep.subr.bf16.mxu0 0
  %1008 = vmatpush2.bf16.msra.mxu0 0
  %1009 = vmatprep.subr.bf16.mxu0 0
  %1010 = vmatpush2.bf16.msra.mxu0 0
  %1011 = vmatprep.subr.bf16.mxu0 0
  %1012 = vmatpush2.bf16.msra.mxu0 0
  %1013 = vmatprep.subr.bf16.mxu0 0
  %1014 = vmatpush2.bf16.msra.mxu0 0
  %1015 = vmatprep.subr.bf16.mxu0 0
  %1016 = vmatpush2.bf16.msra.mxu0 0
  %1017 = vmatprep.subr.bf16.mxu0 0
  %1018 = vmatpush2.bf16.msra.mxu0 0
  %1019 = vmatprep.subr.bf16.mxu0 0
  %1020 = vmatpush2.bf16.msra.mxu0 0
  %1021 = vmatprep.subr.bf16.mxu0 0
  %1022 = vmatpush2.bf16.msra.mxu0 0
  %1023 = vmatprep.mubr.bf16.mxu0 0
  %1024 = vmatmul.mubr.bf16.gmra.mxu0 %v202
  %v1025 = vpop.f32.mrf.mxu0
  %v1026 = vadd.f32 0.0, %v1025
  %v1027 = vpop.f32.mrf.mxu0
  %v1028 = vpop.f32.mrf.mxu0
  %v1029 = vpop.f32.mrf.mxu0
  %1030 = vdwg.mxu0
  %v1031 = vadd.f32 %v978, %v1026
  %v1032 = vxor.u32 %v1031, 2147483648
  %v1033 = vmul.f32 %v1032, 1.442695
  %v1034 = vpow.pop %v1033
  %v1035 = vadd.f32 %v1034, 1.0
  %v1036 = vrcp.pop %v1035
  %v1037 = vmul.f32 1.0, %v1036
  %v1038 = vtanh.pop %v1031
  %v1039 = vmul.f32 %v1037, 0.0
  %1041 = vrot.lane.b32.xlu0 %v1038, 64
  %v1042 = vpop.permute.xlu0 %1041
  %v1044 = vmul.f32 %v1037, %v1042
  %1046 = vrot.lane.b32.xlu0 %v1044, 32
  %v1047 = vpop.permute.xlu0 %1046
  %v1049 = vadd.f32 %v1039, %v1047
  %v1050 = vtanh.pop %v1049
  %1052 = vrot.lane.b32.xlu0 %v1050, 64
  %v1053 = vpop.permute.xlu0 %1052
  %v1055 = vmul.f32 %v1037, %v1053
  %v1056 = vld [vmem:[#allocation2 + $0x8] sm:$0xff]
  %v1057 = vpack.c.bf16 %v1055, %v1055
  %1059 = vrot.lane.b32.xlu0 %v1057, 32
  %v1060 = vpop.permute.xlu0 %1059
  %v1062 = vsel %vm200, %v1060, 0
  %1064 = vmatprep.subr.bf16.mxu0 0
  %1065 = vmatpush1.bf16.msra.mxu0 0
  %1066 = vmatprep.subr.bf16.mxu0 0
  %1067 = vmatpush1.bf16.msra.mxu0 0
  %1068 = vmatprep.subr.bf16.mxu0 0
  %1069 = vmatpush1.bf16.msra.mxu0 0
  %1070 = vmatprep.subr.bf16.mxu0 0
  %1071 = vmatpush1.bf16.msra.mxu0 0
  %1072 = vmatprep.subr.bf16.mxu0 0
  %1073 = vmatpush1.bf16.msra.mxu0 0
  %1074 = vmatprep.subr.bf16.mxu0 0
  %1075 = vmatpush1.bf16.msra.mxu0 0
  %1076 = vmatprep.subr.bf16.mxu0 0
  %1077 = vmatpush1.bf16.msra.mxu0 %v988
  %1078 = vmatprep.subr.bf16.mxu0 0
  %1079 = vmatpush1.bf16.msra.mxu0 %v987
  %1080 = vmatprep.subr.bf16.mxu0 0
  %1081 = vmatpush2.bf16.msra.mxu0 0
  %1082 = vmatprep.subr.bf16.mxu0 0
  %1083 = vmatpush2.bf16.msra.mxu0 0
  %1084 = vmatprep.subr.bf16.mxu0 0
  %1085 = vmatpush2.bf16.msra.mxu0 0
  %1086 = vmatprep.subr.bf16.mxu0 0
  %1087 = vmatpush2.bf16.msra.mxu0 0
  %1088 = vmatprep.subr.bf16.mxu0 0
  %1089 = vmatpush2.bf16.msra.mxu0 0
  %1090 = vmatprep.subr.bf16.mxu0 0
  %1091 = vmatpush2.bf16.msra.mxu0 0
  %1092 = vmatprep.subr.bf16.mxu0 0
  %1093 = vmatpush2.bf16.msra.mxu0 0
  %1094 = vmatprep.subr.bf16.mxu0 0
  %1095 = vmatpush2.bf16.msra.mxu0 0
  %1096 = vmatprep.mubr.bf16.mxu0 0
  %1097 = vmatmul.mubr.bf16.gmra.mxu0 %v1062
  %v1098 = vpop.f32.mrf.mxu0
  %v1099 = vadd.f32 0.0, %v1098
  %v1100 = vpop.f32.mrf.mxu0
  %v1101 = vpop.f32.mrf.mxu0
  %v1102 = vpop.f32.mrf.mxu0
  %1103 = vdwg.mxu0
  %v1104 = vadd.f32 %v1056, %v1099
  %v1105 = vxor.u32 %v1104, 2147483648
  %v1106 = vmul.f32 %v1105, 1.442695
  %v1107 = vpow.pop %v1106
  %v1108 = vadd.f32 %v1107, 1.0
  %v1109 = vrcp.pop %v1108
  %v1110 = vmul.f32 1.0, %v1109
  %v1111 = vtanh.pop %v1104
  %v1112 = vmul.f32 %v1110, %v1049
  %1114 = vrot.lane.b32.xlu0 %v1111, 64
  %v1115 = vpop.permute.xlu0 %1114
  %v1117 = vmul.f32 %v1110, %v1115
  %1119 = vrot.lane.b32.xlu0 %v1117, 32
  %v1120 = vpop.permute.xlu0 %1119
  %v1122 = vadd.f32 %v1112, %v1120
  %v1123 = vtanh.pop %v1122
  %1125 = vrot.lane.b32.xlu0 %v1123, 64
  %v1126 = vpop.permute.xlu0 %1125
  %v1128 = vmul.f32 %v1110, %v1126
  %v1129 = vld [vmem:[#allocation2 + $0x10] sm:$0xff]
  %v1130 = vpack.c.bf16 %v1128, %v1128
  %1132 = vrot.lane.b32.xlu0 %v1130, 32
  %v1133 = vpop.permute.xlu0 %1132
  %v1135 = vsel %vm200, %v1133, 0
  %1137 = vmatprep.subr.bf16.mxu0 0
  %1138 = vmatpush1.bf16.msra.mxu0 0
  %1139 = vmatprep.subr.bf16.mxu0 0
  %1140 = vmatpush1.bf16.msra.mxu0 0
  %1141 = vmatprep.subr.bf16.mxu0 0
  %1142 = vmatpush1.bf16.msra.mxu0 0
  %1143 = vmatprep.subr.bf16.mxu0 0
  %1144 = vmatpush1.bf16.msra.mxu0 0
  %1145 = vmatprep.subr.bf16.mxu0 0
  %1146 = vmatpush1.bf16.msra.mxu0 0
  %1147 = vmatprep.subr.bf16.mxu0 0
  %1148 = vmatpush1.bf16.msra.mxu0 0
  %1149 = vmatprep.subr.bf16.mxu0 0
  %1150 = vmatpush1.bf16.msra.mxu0 %v988
  %1151 = vmatprep.subr.bf16.mxu0 0
  %1152 = vmatpush1.bf16.msra.mxu0 %v987
  %1153 = vmatprep.subr.bf16.mxu0 0
  %1154 = vmatpush2.bf16.msra.mxu0 0
  %1155 = vmatprep.subr.bf16.mxu0 0
  %1156 = vmatpush2.bf16.msra.mxu0 0
  %1157 = vmatprep.subr.bf16.mxu0 0
  %1158 = vmatpush2.bf16.msra.mxu0 0
  %1159 = vmatprep.subr.bf16.mxu0 0
  %1160 = vmatpush2.bf16.msra.mxu0 0
  %1161 = vmatprep.subr.bf16.mxu0 0
  %1162 = vmatpush2.bf16.msra.mxu0 0
  %1163 = vmatprep.subr.bf16.mxu0 0
  %1164 = vmatpush2.bf16.msra.mxu0 0
  %1165 = vmatprep.subr.bf16.mxu0 0
  %1166 = vmatpush2.bf16.msra.mxu0 0
  %1167 = vmatprep.subr.bf16.mxu0 0
  %1168 = vmatpush2.bf16.msra.mxu0 0
  %1169 = vmatprep.mubr.bf16.mxu0 0
  %1170 = vmatmul.mubr.bf16.gmra.mxu0 %v1135
  %v1171 = vpop.f32.mrf.mxu0
  %v1172 = vadd.f32 0.0, %v1171
  %v1173 = vpop.f32.mrf.mxu0
  %v1174 = vpop.f32.mrf.mxu0
  %v1175 = vpop.f32.mrf.mxu0
  %1176 = vdwg.mxu0
  %v1177 = vadd.f32 %v1129, %v1172
  %v1178 = vxor.u32 %v1177, 2147483648
  %v1179 = vmul.f32 %v1178, 1.442695
  %v1180 = vpow.pop %v1179
  %v1181 = vadd.f32 %v1180, 1.0
  %v1182 = vrcp.pop %v1181
  %v1183 = vmul.f32 1.0, %v1182
  %v1184 = vtanh.pop %v1177
  %v1185 = vmul.f32 %v1183, %v1122
  %1187 = vrot.lane.b32.xlu0 %v1184, 64
  %v1188 = vpop.permute.xlu0 %1187
  %v1190 = vmul.f32 %v1183, %v1188
  %1192 = vrot.lane.b32.xlu0 %v1190, 32
  %v1193 = vpop.permute.xlu0 %1192
  %v1195 = vadd.f32 %v1185, %v1193
  %v1196 = vtanh.pop %v1195
  %1198 = vrot.lane.b32.xlu0 %v1196, 64
  %v1199 = vpop.permute.xlu0 %1198
  %v1201 = vmul.f32 %v1183, %v1199
  %v1202 = vld [vmem:[#allocation2 + $0x18] sm:$0xff]
  %v1203 = vpack.c.bf16 %v1201, %v1201
  %1205 = vrot.lane.b32.xlu0 %v1203, 32
  %v1206 = vpop.permute.xlu0 %1205
  %v1208 = vsel %vm200, %v1206, 0
  %1210 = vmatprep.subr.bf16.mxu0 0
  %1211 = vmatpush1.bf16.msra.mxu0 0
  %1212 = vmatprep.subr.bf16.mxu0 0
  %1213 = vmatpush1.bf16.msra.mxu0 0
  %1214 = vmatprep.subr.bf16.mxu0 0
  %1215 = vmatpush1.bf16.msra.mxu0 0
  %1216 = vmatprep.subr.bf16.mxu0 0
  %1217 = vmatpush1.bf16.msra.mxu0 0
  %1218 = vmatprep.subr.bf16.mxu0 0
  %1219 = vmatpush1.bf16.msra.mxu0 0
  %1220 = vmatprep.subr.bf16.mxu0 0
  %1221 = vmatpush1.bf16.msra.mxu0 0
  %1222 = vmatprep.subr.bf16.mxu0 0
  %1223 = vmatpush1.bf16.msra.mxu0 %v988
  %1224 = vmatprep.subr.bf16.mxu0 0
  %1225 = vmatpush1.bf16.msra.mxu0 %v987
  %1226 = vmatprep.subr.bf16.mxu0 0
  %1227 = vmatpush2.bf16.msra.mxu0 0
  %1228 = vmatprep.subr.bf16.mxu0 0
  %1229 = vmatpush2.bf16.msra.mxu0 0
  %1230 = vmatprep.subr.bf16.mxu0 0
  %1231 = vmatpush2.bf16.msra.mxu0 0
  %1232 = vmatprep.subr.bf16.mxu0 0
  %1233 = vmatpush2.bf16.msra.mxu0 0
  %1234 = vmatprep.subr.bf16.mxu0 0
  %1235 = vmatpush2.bf16.msra.mxu0 0
  %1236 = vmatprep.subr.bf16.mxu0 0
  %1237 = vmatpush2.bf16.msra.mxu0 0
  %1238 = vmatprep.subr.bf16.mxu0 0
  %1239 = vmatpush2.bf16.msra.mxu0 0
  %1240 = vmatprep.subr.bf16.mxu0 0
  %1241 = vmatpush2.bf16.msra.mxu0 0
  %1242 = vmatprep.mubr.bf16.mxu0 0
  %1243 = vmatmul.mubr.bf16.gmra.mxu0 %v1208
  %v1244 = vpop.f32.mrf.mxu0
  %v1245 = vadd.f32 0.0, %v1244
  %v1246 = vpop.f32.mrf.mxu0
  %v1247 = vpop.f32.mrf.mxu0
  %v1248 = vpop.f32.mrf.mxu0
  %1249 = vdwg.mxu0
  %v1250 = vadd.f32 %v1202, %v1245
  %v1251 = vxor.u32 %v1250, 2147483648
  %v1252 = vmul.f32 %v1251, 1.442695
  %v1253 = vpow.pop %v1252
  %v1254 = vadd.f32 %v1253, 1.0
  %v1255 = vrcp.pop %v1254
  %v1256 = vmul.f32 1.0, %v1255
  %v1257 = vtanh.pop %v1250
  %v1258 = vmul.f32 %v1256, %v1195
  %1260 = vrot.lane.b32.xlu0 %v1257, 64
  %v1261 = vpop.permute.xlu0 %1260
  %v1263 = vmul.f32 %v1256, %v1261
  %1265 = vrot.lane.b32.xlu0 %v1263, 32
  %v1266 = vpop.permute.xlu0 %1265
  %v1268 = vadd.f32 %v1258, %v1266
  %v1269 = vtanh.pop %v1268
  %1271 = vrot.lane.b32.xlu0 %v1269, 64
  %v1272 = vpop.permute.xlu0 %1271
  %v1274 = vmul.f32 %v1256, %v1272
  %v1275 = vld [vmem:[#allocation2 + $0x20] sm:$0xff]
  %v1276 = vpack.c.bf16 %v1274, %v1274
  %1278 = vrot.lane.b32.xlu0 %v1276, 32
  %v1279 = vpop.permute.xlu0 %1278
  %v1281 = vsel %vm200, %v1279, 0
  %1283 = vmatprep.subr.bf16.mxu0 0
  %1284 = vmatpush1.bf16.msra.mxu0 0
  %1285 = vmatprep.subr.bf16.mxu0 0
  %1286 = vmatpush1.bf16.msra.mxu0 0
  %1287 = vmatprep.subr.bf16.mxu0 0
  %1288 = vmatpush1.bf16.msra.mxu0 0
  %1289 = vmatprep.subr.bf16.mxu0 0
  %1290 = vmatpush1.bf16.msra.mxu0 0
  %1291 = vmatprep.subr.bf16.mxu0 0
  %1292 = vmatpush1.bf16.msra.mxu0 0
  %1293 = vmatprep.subr.bf16.mxu0 0
  %1294 = vmatpush1.bf16.msra.mxu0 0
  %1295 = vmatprep.subr.bf16.mxu0 0
  %1296 = vmatpush1.bf16.msra.mxu0 %v988
  %1297 = vmatprep.subr.bf16.mxu0 0
  %1298 = vmatpush1.bf16.msra.mxu0 %v987
  %1299 = vmatprep.subr.bf16.mxu0 0
  %1300 = vmatpush2.bf16.msra.mxu0 0
  %1301 = vmatprep.subr.bf16.mxu0 0
  %1302 = vmatpush2.bf16.msra.mxu0 0
  %1303 = vmatprep.subr.bf16.mxu0 0
  %1304 = vmatpush2.bf16.msra.mxu0 0
  %1305 = vmatprep.subr.bf16.mxu0 0
  %1306 = vmatpush2.bf16.msra.mxu0 0
  %1307 = vmatprep.subr.bf16.mxu0 0
  %1308 = vmatpush2.bf16.msra.mxu0 0
  %1309 = vmatprep.subr.bf16.mxu0 0
  %1310 = vmatpush2.bf16.msra.mxu0 0
  %1311 = vmatprep.subr.bf16.mxu0 0
  %1312 = vmatpush2.bf16.msra.mxu0 0
  %1313 = vmatprep.subr.bf16.mxu0 0
  %1314 = vmatpush2.bf16.msra.mxu0 0
  %1315 = vmatprep.mubr.bf16.mxu0 0
  %1316 = vmatmul.mubr.bf16.gmra.mxu0 %v1281
  %v1317 = vpop.f32.mrf.mxu0
  %v1318 = vadd.f32 0.0, %v1317
  %v1319 = vpop.f32.mrf.mxu0
  %v1320 = vpop.f32.mrf.mxu0
  %v1321 = vpop.f32.mrf.mxu0
  %1322 = vdwg.mxu0
  %v1323 = vadd.f32 %v1275, %v1318
  %v1324 = vxor.u32 %v1323, 2147483648
  %v1325 = vmul.f32 %v1324, 1.442695
  %v1326 = vpow.pop %v1325
  %v1327 = vadd.f32 %v1326, 1.0
  %v1328 = vrcp.pop %v1327
  %v1329 = vmul.f32 1.0, %v1328
  %v1330 = vtanh.pop %v1323
  %v1331 = vmul.f32 %v1329, %v1268
  %1333 = vrot.lane.b32.xlu0 %v1330, 64
  %v1334 = vpop.permute.xlu0 %1333
  %v1336 = vmul.f32 %v1329, %v1334
  %1338 = vrot.lane.b32.xlu0 %v1336, 32
  %v1339 = vpop.permute.xlu0 %1338
  %v1341 = vadd.f32 %v1331, %v1339
  %v1342 = vtanh.pop %v1341
  %1344 = vrot.lane.b32.xlu0 %v1342, 64
  %v1345 = vpop.permute.xlu0 %1344
  %v1347 = vmul.f32 %v1329, %v1345
  %v1348 = vld [vmem:[#allocation2 + $0x28] sm:$0xff]
  %v1349 = vpack.c.bf16 %v1347, %v1347
  %1351 = vrot.lane.b32.xlu0 %v1349, 32
  %v1352 = vpop.permute.xlu0 %1351
  %v1354 = vsel %vm200, %v1352, 0
  %1356 = vmatprep.subr.bf16.mxu0 0
  %1357 = vmatpush1.bf16.msra.mxu0 0
  %1358 = vmatprep.subr.bf16.mxu0 0
  %1359 = vmatpush1.bf16.msra.mxu0 0
  %1360 = vmatprep.subr.bf16.mxu0 0
  %1361 = vmatpush1.bf16.msra.mxu0 0
  %1362 = vmatprep.subr.bf16.mxu0 0
  %1363 = vmatpush1.bf16.msra.mxu0 0
  %1364 = vmatprep.subr.bf16.mxu0 0
  %1365 = vmatpush1.bf16.msra.mxu0 0
  %1366 = vmatprep.subr.bf16.mxu0 0
  %1367 = vmatpush1.bf16.msra.mxu0 0
  %1368 = vmatprep.subr.bf16.mxu0 0
  %1369 = vmatpush1.bf16.msra.mxu0 %v988
  %1370 = vmatprep.subr.bf16.mxu0 0
  %1371 = vmatpush1.bf16.msra.mxu0 %v987
  %1372 = vmatprep.subr.bf16.mxu0 0
  %1373 = vmatpush2.bf16.msra.mxu0 0
  %1374 = vmatprep.subr.bf16.mxu0 0
  %1375 = vmatpush2.bf16.msra.mxu0 0
  %1376 = vmatprep.subr.bf16.mxu0 0
  %1377 = vmatpush2.bf16.msra.mxu0 0
  %1378 = vmatprep.subr.bf16.mxu0 0
  %1379 = vmatpush2.bf16.msra.mxu0 0
  %1380 = vmatprep.subr.bf16.mxu0 0
  %1381 = vmatpush2.bf16.msra.mxu0 0
  %1382 = vmatprep.subr.bf16.mxu0 0
  %1383 = vmatpush2.bf16.msra.mxu0 0
  %1384 = vmatprep.subr.bf16.mxu0 0
  %1385 = vmatpush2.bf16.msra.mxu0 0
  %1386 = vmatprep.subr.bf16.mxu0 0
  %1387 = vmatpush2.bf16.msra.mxu0 0
  %1388 = vmatprep.mubr.bf16.mxu0 0
  %1389 = vmatmul.mubr.bf16.gmra.mxu0 %v1354
  %v1390 = vpop.f32.mrf.mxu0
  %v1391 = vadd.f32 0.0, %v1390
  %v1392 = vpop.f32.mrf.mxu0
  %v1393 = vpop.f32.mrf.mxu0
  %v1394 = vpop.f32.mrf.mxu0
  %1395 = vdwg.mxu0
  %v1396 = vadd.f32 %v1348, %v1391
  %v1397 = vxor.u32 %v1396, 2147483648
  %v1398 = vmul.f32 %v1397, 1.442695
  %v1399 = vpow.pop %v1398
  %v1400 = vadd.f32 %v1399, 1.0
  %v1401 = vrcp.pop %v1400
  %v1402 = vmul.f32 1.0, %v1401
  %v1403 = vtanh.pop %v1396
  %v1404 = vmul.f32 %v1402, %v1341
  %1406 = vrot.lane.b32.xlu0 %v1403, 64
  %v1407 = vpop.permute.xlu0 %1406
  %v1409 = vmul.f32 %v1402, %v1407
  %1411 = vrot.lane.b32.xlu0 %v1409, 32
  %v1412 = vpop.permute.xlu0 %1411
  %v1414 = vadd.f32 %v1404, %v1412
  %v1415 = vtanh.pop %v1414
  %1417 = vrot.lane.b32.xlu0 %v1415, 64
  %v1418 = vpop.permute.xlu0 %1417
  %v1420 = vmul.f32 %v1402, %v1418
  %v1421 = vld [vmem:[#allocation2 + $0x30] sm:$0xff]
  %v1422 = vpack.c.bf16 %v1420, %v1420
  %1424 = vrot.lane.b32.xlu0 %v1422, 32
  %v1425 = vpop.permute.xlu0 %1424
  %v1427 = vsel %vm200, %v1425, 0
  %1429 = vmatprep.subr.bf16.mxu0 0
  %1430 = vmatpush1.bf16.msra.mxu0 0
  %1431 = vmatprep.subr.bf16.mxu0 0
  %1432 = vmatpush1.bf16.msra.mxu0 0
  %1433 = vmatprep.subr.bf16.mxu0 0
  %1434 = vmatpush1.bf16.msra.mxu0 0
  %1435 = vmatprep.subr.bf16.mxu0 0
  %1436 = vmatpush1.bf16.msra.mxu0 0
  %1437 = vmatprep.subr.bf16.mxu0 0
  %1438 = vmatpush1.bf16.msra.mxu0 0
  %1439 = vmatprep.subr.bf16.mxu0 0
  %1440 = vmatpush1.bf16.msra.mxu0 0
  %1441 = vmatprep.subr.bf16.mxu0 0
  %1442 = vmatpush1.bf16.msra.mxu0 %v988
  %1443 = vmatprep.subr.bf16.mxu0 0
  %1444 = vmatpush1.bf16.msra.mxu0 %v987
  %1445 = vmatprep.subr.bf16.mxu0 0
  %1446 = vmatpush2.bf16.msra.mxu0 0
  %1447 = vmatprep.subr.bf16.mxu0 0
  %1448 = vmatpush2.bf16.msra.mxu0 0
  %1449 = vmatprep.subr.bf16.mxu0 0
  %1450 = vmatpush2.bf16.msra.mxu0 0
  %1451 = vmatprep.subr.bf16.mxu0 0
  %1452 = vmatpush2.bf16.msra.mxu0 0
  %1453 = vmatprep.subr.bf16.mxu0 0
  %1454 = vmatpush2.bf16.msra.mxu0 0
  %1455 = vmatprep.subr.bf16.mxu0 0
  %1456 = vmatpush2.bf16.msra.mxu0 0
  %1457 = vmatprep.subr.bf16.mxu0 0
  %1458 = vmatpush2.bf16.msra.mxu0 0
  %1459 = vmatprep.subr.bf16.mxu0 0
  %1460 = vmatpush2.bf16.msra.mxu0 0
  %1461 = vmatprep.mubr.bf16.mxu0 0
  %1462 = vmatmul.mubr.bf16.gmra.mxu0 %v1427
  %v1463 = vpop.f32.mrf.mxu0
  %v1464 = vadd.f32 0.0, %v1463
  %v1465 = vpop.f32.mrf.mxu0
  %v1466 = vpop.f32.mrf.mxu0
  %v1467 = vpop.f32.mrf.mxu0
  %1468 = vdwg.mxu0
  %v1469 = vadd.f32 %v1421, %v1464
  %v1470 = vxor.u32 %v1469, 2147483648
  %v1471 = vmul.f32 %v1470, 1.442695
  %v1472 = vpow.pop %v1471
  %v1473 = vadd.f32 %v1472, 1.0
  %v1474 = vrcp.pop %v1473
  %v1475 = vmul.f32 1.0, %v1474
  %v1476 = vtanh.pop %v1469
  %v1477 = vmul.f32 %v1475, %v1414
  %1479 = vrot.lane.b32.xlu0 %v1476, 64
  %v1480 = vpop.permute.xlu0 %1479
  %v1482 = vmul.f32 %v1475, %v1480
  %1484 = vrot.lane.b32.xlu0 %v1482, 32
  %v1485 = vpop.permute.xlu0 %1484
  %v1487 = vadd.f32 %v1477, %v1485
  %v1488 = vtanh.pop %v1487
  %1490 = vrot.lane.b32.xlu0 %v1488, 64
  %v1491 = vpop.permute.xlu0 %1490
  %v1493 = vmul.f32 %v1475, %v1491
  %v1494 = vld [vmem:[#allocation2 + $0x38] sm:$0xff]
  %v1495 = vpack.c.bf16 %v1493, %v1493
  %1497 = vrot.lane.b32.xlu0 %v1495, 32
  %v1498 = vpop.permute.xlu0 %1497
  %v1500 = vsel %vm200, %v1498, 0
  %1502 = vmatprep.subr.bf16.mxu0 0
  %1503 = vmatpush1.bf16.msra.mxu0 0
  %1504 = vmatprep.subr.bf16.mxu0 0
  %1505 = vmatpush1.bf16.msra.mxu0 0
  %1506 = vmatprep.subr.bf16.mxu0 0
  %1507 = vmatpush1.bf16.msra.mxu0 0
  %1508 = vmatprep.subr.bf16.mxu0 0
  %1509 = vmatpush1.bf16.msra.mxu0 0
  %1510 = vmatprep.subr.bf16.mxu0 0
  %1511 = vmatpush1.bf16.msra.mxu0 0
  %1512 = vmatprep.subr.bf16.mxu0 0
  %1513 = vmatpush1.bf16.msra.mxu0 0
  %1514 = vmatprep.subr.bf16.mxu0 0
  %1515 = vmatpush1.bf16.msra.mxu0 %v988
  %1516 = vmatprep.subr.bf16.mxu0 0
  %1517 = vmatpush1.bf16.msra.mxu0 %v987
  %1518 = vmatprep.subr.bf16.mxu0 0
  %1519 = vmatpush2.bf16.msra.mxu0 0
  %1520 = vmatprep.subr.bf16.mxu0 0
  %1521 = vmatpush2.bf16.msra.mxu0 0
  %1522 = vmatprep.subr.bf16.mxu0 0
  %1523 = vmatpush2.bf16.msra.mxu0 0
  %1524 = vmatprep.subr.bf16.mxu0 0
  %1525 = vmatpush2.bf16.msra.mxu0 0
  %1526 = vmatprep.subr.bf16.mxu0 0
  %1527 = vmatpush2.bf16.msra.mxu0 0
  %1528 = vmatprep.subr.bf16.mxu0 0
  %1529 = vmatpush2.bf16.msra.mxu0 0
  %1530 = vmatprep.subr.bf16.mxu0 0
  %1531 = vmatpush2.bf16.msra.mxu0 0
  %1532 = vmatprep.subr.bf16.mxu0 0
  %1533 = vmatpush2.bf16.msra.mxu0 0
  %1534 = vmatprep.mubr.bf16.mxu0 0
  %1535 = vmatmul.mubr.bf16.gmra.mxu0 %v1500
  %v1536 = vpop.f32.mrf.mxu0
  %v1537 = vadd.f32 0.0, %v1536
  %v1538 = vpop.f32.mrf.mxu0
  %v1539 = vpop.f32.mrf.mxu0
  %v1540 = vpop.f32.mrf.mxu0
  %1541 = vdwg.mxu0
  %v1542 = vadd.f32 %v1494, %v1537
  %v1543 = vxor.u32 %v1542, 2147483648
  %v1544 = vmul.f32 %v1543, 1.442695
  %v1545 = vpow.pop %v1544
  %v1546 = vadd.f32 %v1545, 1.0
  %v1547 = vrcp.pop %v1546
  %v1548 = vmul.f32 1.0, %v1547
  %v1549 = vtanh.pop %v1542
  %v1550 = vmul.f32 %v1548, %v1487
  %1552 = vrot.lane.b32.xlu0 %v1549, 64
  %v1553 = vpop.permute.xlu0 %1552
  %v1555 = vmul.f32 %v1548, %v1553
  %1557 = vrot.lane.b32.xlu0 %v1555, 32
  %v1558 = vpop.permute.xlu0 %1557
  %v1560 = vadd.f32 %v1550, %v1558
  %v1561 = vtanh.pop %v1560
  %1563 = vrot.lane.b32.xlu0 %v1561, 64
  %v1564 = vpop.permute.xlu0 %1563
  %v1566 = vmul.f32 %v1548, %v1564
  %v1567 = vld [vmem:[%s6] sm:$0xff]
  %v1568 = vld [vmem:[%s6 + $0x8] sm:$0xff]
  %v1569 = vld [vmem:[%s6 + $0x10] sm:$0xff]
  %v1570 = vld [vmem:[%s6 + $0x18] sm:$0xff]
  %v1571 = vld [vmem:[%s7] sm:$0x1]
  %v1572 = vlaneseq
  %v1573 = vshrl.u32 %v1572, 7
  %v1574 = vsub.s32 0, %v1573
  %v1575 = vrot.slane %v1571, %v1574
  %1577 = vrot.lane.b32.xlu0 %v1566, 32
  %v1578 = vpop.permute.xlu0 %1577
  %v1579 = vsel %vm200, %v1578, 0
  %1581 = vmatprep.subr.mxu0 0.0
  %1582 = vmatpush1.msra.mxu0 0.0
  %1583 = vmatprep.subr.mxu0 0.0
  %1584 = vmatpush1.msra.mxu0 0.0
  %1585 = vmatprep.subr.mxu0 0.0
  %1586 = vmatpush1.msra.mxu0 0.0
  %1587 = vmatprep.subr.mxu0 0.0
  %1588 = vmatpush1.msra.mxu0 0.0
  %1589 = vmatprep.subr.mxu0 0.0
  %1590 = vmatpush1.msra.mxu0 0.0
  %1591 = vmatprep.subr.mxu0 0.0
  %1592 = vmatpush1.msra.mxu0 0.0
  %1593 = vmatprep.subr.mxu0 0.0
  %1594 = vmatpush1.msra.mxu0 0.0
  %1595 = vmatprep.subr.mxu0 0.0
  %1596 = vmatpush1.msra.mxu0 0.0
  %1597 = vmatprep.subr.mxu0 0.0
  %1598 = vmatpush1.msra.mxu0 0.0
  %1599 = vmatprep.subr.mxu0 0.0
  %1600 = vmatpush1.msra.mxu0 0.0
  %1601 = vmatprep.subr.mxu0 0.0
  %1602 = vmatpush1.msra.mxu0 0.0
  %1603 = vmatprep.subr.mxu0 0.0
  %1604 = vmatpush1.msra.mxu0 0.0
  %1605 = vmatprep.subr.mxu0 0.0
  %1606 = vmatpush1.msra.mxu0 %v1570
  %1607 = vmatprep.subr.mxu0 0.0
  %1608 = vmatpush1.msra.mxu0 %v1569
  %1609 = vmatprep.subr.mxu0 0.0
  %1610 = vmatpush1.msra.mxu0 %v1568
  %1611 = vmatprep.subr.mxu0 0.0
  %1612 = vmatpush1.msra.mxu0 %v1567
  %1613 = vmatprep.subr.mxu0 0.0
  %1614 = vmatpush2.msra.mxu0 0.0
  %1615 = vmatprep.subr.mxu0 0.0
  %1616 = vmatpush2.msra.mxu0 0.0
  %1617 = vmatprep.subr.mxu0 0.0
  %1618 = vmatpush2.msra.mxu0 0.0
  %1619 = vmatprep.subr.mxu0 0.0
  %1620 = vmatpush2.msra.mxu0 0.0
  %1621 = vmatprep.subr.mxu0 0.0
  %1622 = vmatpush2.msra.mxu0 0.0
  %1623 = vmatprep.subr.mxu0 0.0
  %1624 = vmatpush2.msra.mxu0 0.0
  %1625 = vmatprep.subr.mxu0 0.0
  %1626 = vmatpush2.msra.mxu0 0.0
  %1627 = vmatprep.subr.mxu0 0.0
  %1628 = vmatpush2.msra.mxu0 0.0
  %1629 = vmatprep.subr.mxu0 0.0
  %1630 = vmatpush2.msra.mxu0 0.0
  %1631 = vmatprep.subr.mxu0 0.0
  %1632 = vmatpush2.msra.mxu0 0.0
  %1633 = vmatprep.subr.mxu0 0.0
  %1634 = vmatpush2.msra.mxu0 0.0
  %1635 = vmatprep.subr.mxu0 0.0
  %1636 = vmatpush2.msra.mxu0 0.0
  %1637 = vmatprep.subr.mxu0 0.0
  %1638 = vmatpush2.msra.mxu0 0.0
  %1639 = vmatprep.subr.mxu0 0.0
  %1640 = vmatpush2.msra.mxu0 0.0
  %1641 = vmatprep.subr.mxu0 0.0
  %1642 = vmatpush2.msra.mxu0 0.0
  %1643 = vmatprep.subr.mxu0 0.0
  %1644 = vmatpush2.msra.mxu0 0.0
  %1645 = vmatprep.mubr.f32.mxu0 0.0
  %1646 = vmatmul.mubr.f32.gmra.mxu0 %v1579
  %v1647 = vpop.f32.mrf.mxu0
  %v1648 = vadd.f32 %v1575, %v1647
  %v1649 = vpop.f32.mrf.mxu0
  %1650 = vdwg.mxu0
  %v1651 = vmax.f32 %v1648, 0.0
  %v1652 = vld [vmem:[%s7 + $0x1] sm:$0x1]
  %v1653 = vlaneseq
  %v1654 = vshrl.u32 %v1653, 7
  %v1655 = vsub.s32 0, %v1654
  %v1656 = vrot.slane %v1652, %v1655
  %v1657 = vmul.f32 %v1651, %v1656
  %v1658 = vsel %vm45, %v1657, 0.0
  %1659 = vadd.xlane.f32.xlu0 %v1658
  %v1660 = vpop.xlane.xlu0 %1659
  %v1661 = vld [vmem:[%s7 + $0x2] sm:$0x1]
  %v1662 = vlaneseq
  %v1663 = vshrl.u32 %v1662, 7
  %v1664 = vsub.s32 0, %v1663
  %v1665 = vrot.slane %v1661, %v1664
  %v1666 = vadd.f32 %v1660, %v1665
  %vm1667 = vcmask 7168
  %1668 = vst.msk [vmem:[%s8] sm:$0xff] %vm1667, %v1666
  // Predicated region
  $region34: #{tpu_custom_call.1} parent=0 // pred_check
    _
  $region35: #{tpu_custom_call.1} parent=0 // pred_check_branch
    %1670 = sbr.rel (0) target = $region37
  $region36: #{tpu_custom_call.1} parent=0 // pred_region
    _
  $region37: #{tpu_custom_call.1} parent=0 // pred_fallthru
    _
  // Predicated region
  $region38: #{tpu_custom_call.1} parent=0 // pred_check
    _
  $region39: #{tpu_custom_call.1} parent=0 // pred_check_branch
    %1672 = sbr.rel (0) target = $region41
  $region40: #{tpu_custom_call.1} parent=0 // pred_region
    _
  $region41: #{tpu_custom_call.1} parent=0 // pred_fallthru
    _

</llo_original>
